<compile_context>
chip_gen: v5e
topology: v5e:2x2
jax: 0.10.0
libtpu: 0.0.40
codegen_flags: <defaults>
</compile_context>

<pallas_src>
import math

import jax
import jax.numpy as jnp
from jax.experimental import pallas as pl
from jax.experimental.pallas import tpu as pltpu


_VMEM_PIPELINE_BUDGET = 40 << 20   # headroom under v7x's 64 MiB physical VMEM
_WEIGHT_VMEM_CAP = 4 << 20         # only widen the pack while kron(W) stays tiny


def _packed_linear_kernel(x_ref, w_ref, b_ref, o_ref):
    # x_ref: (TM, P*H)   streamed packed-x tile
    # w_ref: (P*H, P*N)  block-diagonal weight (VMEM-resident: constant index_map)
    # b_ref: (1, P*N)    tiled bias            (VMEM-resident)
    # o_ref: (TM, P*N)   lane-dense output tile
    acc = jnp.dot(x_ref[...], w_ref[...],
                  preferred_element_type=jnp.float32,
                  precision=jax.lax.Precision.HIGHEST)
    o_ref[...] = (acc + b_ref[...]).astype(o_ref.dtype)


def _min_pack(word_len):
    # Smallest P with P * word_len a multiple of 128 (full lane width).
    return 128 // math.gcd(word_len, 128)


def _choose_pack(word_len, hidden, n_rows, itemsize):
    p = _min_pack(word_len)
    p2 = 2 * p
    # Widen when it keeps the packed view zero-copy and the inflated weight small.
    if n_rows % p2 == 0 and (p2 * hidden) * (p2 * word_len) * itemsize <= _WEIGHT_VMEM_CAP:
        return p2
    return p


def pack_linear_params(weight, bias, pack):
    """Block-diagonal weight / tiled bias for the P-row lane-dense fold.

    Precompute once per weight (see make_masked_time_series_forward) so the
    kron is not re-materialized on every forward call.
    """
    w_big = jnp.kron(jnp.eye(pack, dtype=weight.dtype), weight.T)   # (P*H, P*N)
    b_big = jnp.tile(bias, pack).reshape(1, pack * bias.shape[0])   # (1, P*N)
    return w_big, b_big


def _pipeline_vmem_bytes(tm, kp, np_, itemsize):
    # Double-buffered x/out tiles + (double-buffered) resident weight/bias.
    return 2 * itemsize * (tm * (kp + np_) + kp * np_ + np_)


def _choose_row_tile(mp, kp, np_, itemsize, block_rows):
    tm = min(block_rows, mp)
    if mp >= 16:
        # Keep the grid >= 2 steps (>= 4 when it costs little) so both v7x
        # TensorCores get work under dimension_semantics=("parallel",).
        target_steps = 4 if mp >= 32 else 2
        chunk = -(-mp // target_steps)        # cdiv
        chunk = -(-chunk // 8) * 8            # round up to sublane multiple
        tm = min(tm, chunk)
    if tm < mp:
        tm = max(8, (tm // 8) * 8)            # (8,128) rule unless full extent
    while tm > 8 and _pipeline_vmem_bytes(tm, kp, np_, itemsize) > _VMEM_PIPELINE_BUDGET:
        tm = max(8, ((tm // 2) // 8) * 8)
    return tm


def _vmem_limit_bytes(tm, kp, np_, itemsize):
    est = _pipeline_vmem_bytes(tm, kp, np_, itemsize) + (2 << 20)
    return int(min(max(est, 32 << 20), 64 << 20))


def masked_time_series_forward(x, weight, bias, *, block_rows=2048, packed=None):
    """Pallas implementation of MaskedTimeSeriesModel.forward.

    x:      (B, S, H)       float32
    weight: (word_len, H)   PyTorch nn.Linear layout
    bias:   (word_len,)
    packed: optional {pack: (w_big, b_big)} from pack_linear_params
    returns (B, S*word_len, 1)
    """
    B, S, H = x.shape
    N = weight.shape[0]
    M = B * S
    itemsize = jnp.dtype(x.dtype).itemsize

    x2d = x.reshape(M, H)                       # zero-copy view

    P = _choose_pack(N, H, M, itemsize)
    M_aligned = (M // P) * P
    Mp = M_aligned // P

    if Mp == 0:
        # Too few rows to fill even one packed row: plain JAX is optimal.
        y = x2d @ weight.T + bias
        return y.reshape(B, S * N, 1)

    if packed is not None and P in packed:
        w_big, b_big = packed[P]
    else:
        w_big, b_big = pack_linear_params(weight, bias, P)

    Kp = P * H
    Np = P * N

    if M_aligned == M:
        xp = x2d.reshape(Mp, Kp)                # zero-copy row fold (common case)
    else:
        # Awkward row count: kernel handles the aligned prefix; the < P
        # leftover rows are handled by a tiny plain-JAX matmul below.
        xp = x2d[:M_aligned].reshape(Mp, Kp)

    TM = _choose_row_tile(Mp, Kp, Np, itemsize, block_rows)

    out_packed = pl.pallas_call(
        _packed_linear_kernel,
        out_shape=jax.ShapeDtypeStruct((Mp, Np), x.dtype),
        grid_spec=pltpu.PrefetchScalarGridSpec(
            num_scalar_prefetch=0,
            grid=(pl.cdiv(Mp, TM),),
            in_specs=[
                pl.BlockSpec((TM, Kp), lambda i: (i, 0)),   # streamed x tiles
                pl.BlockSpec((Kp, Np), lambda i: (0, 0)),   # VMEM-resident weight
                pl.BlockSpec((1, Np), lambda i: (0, 0)),    # VMEM-resident bias
            ],
            out_specs=pl.BlockSpec((TM, Np), lambda i: (i, 0)),
        ),
        compiler_params=pltpu.CompilerParams(
            dimension_semantics=("parallel",),
            vmem_limit_bytes=_vmem_limit_bytes(TM, Kp, Np, itemsize),
        ),
    )(xp, w_big, b_big)

    # Row-major order of (Mp, P*N) equals (M_aligned, N).
    out_flat = out_packed.reshape(M_aligned * N)
    if M_aligned != M:
        tail = x2d[M_aligned:] @ weight.T + bias            # < P rows, tiny
        out_flat = jnp.concatenate(
            [out_flat, tail.reshape((M - M_aligned) * N)])
    # torch.flatten(start_dim=1).unsqueeze(-1)
    return out_flat.reshape(B, S * N, 1)


def make_masked_time_series_forward(weight, bias, *, block_rows=2048):
    """Precompute the kron-inflated params once; return a jitted forward fn."""
    N, H = weight.shape
    itemsize = jnp.dtype(weight.dtype).itemsize
    p_min = _min_pack(N)
    packs = {p_min}
    if (2 * p_min * H) * (2 * p_min * N) * itemsize <= _WEIGHT_VMEM_CAP:
        packs.add(2 * p_min)
    packed = {p: pack_linear_params(weight, bias, p) for p in packs}

    @jax.jit
    def fwd(x):
        return masked_time_series_forward(
            x, weight, bias, block_rows=block_rows, packed=packed)

    return fwd


if __name__ == "__main__":
    # Small shapes consistent with the module: x = (batch, seq, hidden)
    batch, seq, hidden, word_len = 2, 8, 32, 16

    key = jax.random.PRNGKey(0)
    kx, kw, kb = jax.random.split(key, 3)

    x = jax.random.normal(kx, (batch, seq, hidden), dtype=jnp.float32)
    # Deterministic init of nn.Linear(hidden, word_len) params
    # (PyTorch stores weight as (word_len, hidden), bias as (word_len,))
    bound = 1.0 / (hidden ** 0.5)
    weight = jax.random.uniform(kw, (word_len, hidden),
                                minval=-bound, maxval=bound, dtype=jnp.float32)
    bias = jax.random.uniform(kb, (word_len,),
                              minval=-bound, maxval=bound, dtype=jnp.float32)

    fwd = make_masked_time_series_forward(weight, bias)
    out = jax.block_until_ready(fwd(x))

    # Reference check in plain JAX (same semantics as the PyTorch forward)
    ref = (jnp.einsum('bsh,wh->bsw', x, weight,
                      precision=jax.lax.Precision.HIGHEST) + bias
           ).reshape(batch, seq * word_len, 1)
    assert out.shape == (batch, seq * word_len, 1)
    assert jnp.allclose(out, ref, atol=1e-5, rtol=1e-5)

    # Exercise the leftover-row path (B*S not a multiple of the pack factor).
    x_odd = jax.random.normal(kx, (3, 7, hidden), dtype=jnp.float32)
    out_odd = jax.block_until_ready(
        masked_time_series_forward(x_odd, weight, bias))
    ref_odd = (jnp.einsum('bsh,wh->bsw', x_odd, weight,
                          precision=jax.lax.Precision.HIGHEST) + bias
               ).reshape(3, 7 * word_len, 1)
    assert jnp.allclose(out_odd, ref_odd, atol=1e-5, rtol=1e-5)

    print("KERNEL_OK")
</pallas_src>

<mosaic_0001>
module attributes {stable_mosaic.version = 11 : i64} {
  func.func @_packed_linear_kernel(%arg0: i32, %arg1: memref<1x512xf32, #tpu.memory_space<vmem>>, %arg2: memref<512x256xf32, #tpu.memory_space<vmem>>, %arg3: memref<1x256xf32, #tpu.memory_space<vmem>>, %arg4: memref<1x256xf32, #tpu.memory_space<vmem>>) attributes {dimension_semantics = [#tpu.dimension_semantics<parallel>], iteration_bounds = array<i64: 1>, scalar_prefetch = 0 : i64, scratch_operands = 0 : i64, tpu.core_type = #tpu.core_type<tc>, window_params = [{transform_indices = @transform_0, window_bounds = array<i64: 1, 512>}, {pipeline_mode = #tpu.pipeline_mode<synchronous>, transform_indices = @transform_1, window_bounds = array<i64: 512, 256>}, {pipeline_mode = #tpu.pipeline_mode<synchronous>, transform_indices = @transform_2, window_bounds = array<i64: 1, 256>}, {transform_indices = @transform_3, window_bounds = array<i64: 1, 256>}]} {
    %c0 = arith.constant 0 : index
    %c0_0 = arith.constant 0 : index
    %0 = vector.load %arg1[%c0, %c0_0] : memref<1x512xf32, #tpu.memory_space<vmem>>, vector<1x512xf32>
    %c0_1 = arith.constant 0 : index
    %c0_2 = arith.constant 0 : index
    %1 = vector.load %arg2[%c0_1, %c0_2] : memref<512x256xf32, #tpu.memory_space<vmem>>, vector<512x256xf32>
    %cst = arith.constant dense<0.000000e+00> : vector<1x256xf32>
    %2 = tpu.matmul %0, %1, %cst {dimension_numbers = #tpu.dot_dimension_numbers<[1], [0], [0], [1], [0, 0, 1, 1], [], []>, precision = #tpu.contract_precision<fp32>} : vector<1x512xf32>, vector<512x256xf32>, vector<1x256xf32> -> vector<1x256xf32>
    %c0_3 = arith.constant 0 : index
    %c0_4 = arith.constant 0 : index
    %3 = vector.load %arg3[%c0_3, %c0_4] : memref<1x256xf32, #tpu.memory_space<vmem>>, vector<1x256xf32>
    %4 = arith.addf %2, %3 : vector<1x256xf32>
    %c0_5 = arith.constant 0 : index
    %c0_6 = arith.constant 0 : index
    %5 = vector.load %arg4[%c0_5, %c0_6] : memref<1x256xf32, #tpu.memory_space<vmem>>, vector<1x256xf32>
    tpu.vector_store %arg4[%c0_5, %c0_6], %4 {strides = array<i32>} : memref<1x256xf32, #tpu.memory_space<vmem>>, vector<1x256xf32>,
    return
  }
  func.func @transform_0(%arg0: i32) -> (i32, i32) {
    %c0_i32 = arith.constant 0 : i32
    %c0_i32_0 = arith.constant 0 : i32
    return %arg0, %c0_i32 : i32, i32
  }
  func.func @transform_1(%arg0: i32) -> (i32, i32) {
    %c0_i32 = arith.constant 0 : i32
    %c0_i32_0 = arith.constant 0 : i32
    %c0_i32_1 = arith.constant 0 : i32
    return %c0_i32, %c0_i32_0 : i32, i32
  }
  func.func @transform_2(%arg0: i32) -> (i32, i32) {
    %c0_i32 = arith.constant 0 : i32
    %c0_i32_0 = arith.constant 0 : i32
    %c0_i32_1 = arith.constant 0 : i32
    return %c0_i32, %c0_i32_0 : i32, i32
  }
  func.func @transform_3(%arg0: i32) -> (i32, i32) {
    %c0_i32 = arith.constant 0 : i32
    %c0_i32_0 = arith.constant 0 : i32
    return %arg0, %c0_i32 : i32, i32
  }
}

</mosaic_0001>

<llo_original>
// kernel: fwd.1
$region0: #{fwd.1}
  #allocation0 [shape = 'u32[]', space=smem, size = 0x4, offset = 0x4, fixed_abs, tag = 'smem constant byte address 0x4 - core index']
  #allocation1 [shape = 'u32[72,128]{1,0:T(1,128)}', space=vmem, size = 0x9000, scoped, tag = 'internal scratch']
  %s0 = inlined_call_operand.vmem [shape: f32[1,512], index: 0, kind: input, shape index: {}]
  %s1 = inlined_call_operand.hbm [shape: f32[512,256], index: 1, kind: input, shape index: {}]
  %s2 = inlined_call_operand.vmem [shape: f32[1,256], index: 2, kind: input, shape index: {}]
  %s3 = inlined_call_operand.hbm [shape: f32[1,256], index: 3, kind: output, shape index: {}]
  %s4 = sld [smem:[#allocation0]]
  $region26: #{fwd.1} parent=0
    _
  %s6 = ssub.s32 1, %s4
  %s7 = scalar_select 0, %s6, %s4
  $region1: #{fwd.1} parent=0
    #allocation2 [shape = 'u8[524288]{0}', space=vmem, size = 0x80000, scoped, tag = 'input window, operand 1, single buffered']
    #allocation3 [shape = 's32[1]{0}', space=sflag, size = 0x4, scoped, tag = 'scoped memory for fwd.1']
    #allocation4 [shape = 's32[1]{0}', space=sflag, size = 0x4, scoped, tag = 'scoped memory for fwd.1']
    #allocation5 [shape = 'u8[1024]{0}', space=vmem, size = 0x400, scoped, tag = 'output window, operand 0, single buffered']
    %8 = vsyncpa [#allocation3], 0
    %9 = vsyncpa [#allocation4], 0
    // Predicated region
    $region2: #{fwd.1} parent=1 // pred_check
      _
    $region3: #{fwd.1} parent=1 // pred_check_branch
      %11 = sbr.rel (0) target = $region5
    $region4: #{fwd.1} parent=1 // pred_region
      _
    $region5: #{fwd.1} parent=1 // pred_fallthru
      _
    // Predicated region
    $region6: #{fwd.1} parent=1 // pred_check
      _
    $region7: #{fwd.1} parent=1 // pred_check_branch
      %13 = sbr.rel (0) target = $region9
    $region8: #{fwd.1} parent=1 // pred_region
      %15 = vsyncadd [#allocation3], 0
      %s16 = sshll.u32 %s1, 4
      %s17 = int_to_ptr.hbm [resolvable:$true] %s16
      %s18 = sshll.u32 [#allocation2], 4
      %s19 = int_to_ptr.vmem [resolvable:$true] %s18
      %24 = dma.hbm_to_vmem [thread:$0]  %s17, 16384, %s19, [#allocation3], 256, 256, 16
    $region9: #{fwd.1} parent=1 // pred_fallthru
      _
    // Predicated region
    $region10: #{fwd.1} parent=1 // pred_check
      _
    $region11: #{fwd.1} parent=1 // pred_check_branch
      %26 = sbr.rel (0) target = $region13
    $region12: #{fwd.1} parent=1 // pred_region
      _
    $region13: #{fwd.1} parent=1 // pred_fallthru
      _
    // Predicated region
    $region14: #{fwd.1} parent=1 // pred_check
      _
    $region15: #{fwd.1} parent=1 // pred_check_branch
      %28 = sbr.rel (0) target = $region17
    $region16: #{fwd.1} parent=1 // pred_region
      %30 = dma.done [#allocation3], 16384
    $region17: #{fwd.1} parent=1 // pred_fallthru
      _
    %v31 = vld [vmem:[%s0] sm:$0xf]
    %v32 = vld [vmem:[#allocation2] sm:$0xff]
    %v33 = vld [vmem:[#allocation2 + $0x8] sm:$0xff]
    %v34 = vld [vmem:[#allocation2 + $0x10] sm:$0xff]
    %v35 = vld [vmem:[#allocation2 + $0x18] sm:$0xff]
    %v36 = vld [vmem:[#allocation2 + $0x20] sm:$0xff]
    %v37 = vld [vmem:[#allocation2 + $0x28] sm:$0xff]
    %v38 = vld [vmem:[#allocation2 + $0x30] sm:$0xff]
    %v39 = vld [vmem:[#allocation2 + $0x38] sm:$0xff]
    %v40 = vld [vmem:[#allocation2 + $0x40] sm:$0xff]
    %v41 = vld [vmem:[#allocation2 + $0x48] sm:$0xff]
    %v42 = vld [vmem:[#allocation2 + $0x50] sm:$0xff]
    %v43 = vld [vmem:[#allocation2 + $0x58] sm:$0xff]
    %v44 = vld [vmem:[#allocation2 + $0x60] sm:$0xff]
    %v45 = vld [vmem:[#allocation2 + $0x68] sm:$0xff]
    %v46 = vld [vmem:[#allocation2 + $0x70] sm:$0xff]
    %v47 = vld [vmem:[#allocation2 + $0x78] sm:$0xff]
    %v48 = vld [vmem:[#allocation2 + $0x80] sm:$0xff]
    %v49 = vld [vmem:[#allocation2 + $0x88] sm:$0xff]
    %v50 = vld [vmem:[#allocation2 + $0x90] sm:$0xff]
    %v51 = vld [vmem:[#allocation2 + $0x98] sm:$0xff]
    %v52 = vld [vmem:[#allocation2 + $0xa0] sm:$0xff]
    %v53 = vld [vmem:[#allocation2 + $0xa8] sm:$0xff]
    %v54 = vld [vmem:[#allocation2 + $0xb0] sm:$0xff]
    %v55 = vld [vmem:[#allocation2 + $0xb8] sm:$0xff]
    %v56 = vld [vmem:[#allocation2 + $0xc0] sm:$0xff]
    %v57 = vld [vmem:[#allocation2 + $0xc8] sm:$0xff]
    %v58 = vld [vmem:[#allocation2 + $0xd0] sm:$0xff]
    %v59 = vld [vmem:[#allocation2 + $0xd8] sm:$0xff]
    %v60 = vld [vmem:[#allocation2 + $0xe0] sm:$0xff]
    %v61 = vld [vmem:[#allocation2 + $0xe8] sm:$0xff]
    %v62 = vld [vmem:[#allocation2 + $0xf0] sm:$0xff]
    %v63 = vld [vmem:[#allocation2 + $0xf8] sm:$0xff]
    %v64 = vld [vmem:[#allocation2 + $0x100] sm:$0xff]
    %v65 = vld [vmem:[#allocation2 + $0x108] sm:$0xff]
    %v66 = vld [vmem:[#allocation2 + $0x110] sm:$0xff]
    %v67 = vld [vmem:[#allocation2 + $0x118] sm:$0xff]
    %v68 = vld [vmem:[#allocation2 + $0x120] sm:$0xff]
    %v69 = vld [vmem:[#allocation2 + $0x128] sm:$0xff]
    %v70 = vld [vmem:[#allocation2 + $0x130] sm:$0xff]
    %v71 = vld [vmem:[#allocation2 + $0x138] sm:$0xff]
    %v72 = vld [vmem:[#allocation2 + $0x140] sm:$0xff]
    %v73 = vld [vmem:[#allocation2 + $0x148] sm:$0xff]
    %v74 = vld [vmem:[#allocation2 + $0x150] sm:$0xff]
    %v75 = vld [vmem:[#allocation2 + $0x158] sm:$0xff]
    %v76 = vld [vmem:[#allocation2 + $0x160] sm:$0xff]
    %v77 = vld [vmem:[#allocation2 + $0x168] sm:$0xff]
    %v78 = vld [vmem:[#allocation2 + $0x170] sm:$0xff]
    %v79 = vld [vmem:[#allocation2 + $0x178] sm:$0xff]
    %v80 = vld [vmem:[#allocation2 + $0x180] sm:$0xff]
    %v81 = vld [vmem:[#allocation2 + $0x188] sm:$0xff]
    %v82 = vld [vmem:[#allocation2 + $0x190] sm:$0xff]
    %v83 = vld [vmem:[#allocation2 + $0x198] sm:$0xff]
    %v84 = vld [vmem:[#allocation2 + $0x1a0] sm:$0xff]
    %v85 = vld [vmem:[#allocation2 + $0x1a8] sm:$0xff]
    %v86 = vld [vmem:[#allocation2 + $0x1b0] sm:$0xff]
    %v87 = vld [vmem:[#allocation2 + $0x1b8] sm:$0xff]
    %v88 = vld [vmem:[#allocation2 + $0x1c0] sm:$0xff]
    %v89 = vld [vmem:[#allocation2 + $0x1c8] sm:$0xff]
    %v90 = vld [vmem:[#allocation2 + $0x1d0] sm:$0xff]
    %v91 = vld [vmem:[#allocation2 + $0x1d8] sm:$0xff]
    %v92 = vld [vmem:[#allocation2 + $0x1e0] sm:$0xff]
    %v93 = vld [vmem:[#allocation2 + $0x1e8] sm:$0xff]
    %v94 = vld [vmem:[#allocation2 + $0x1f0] sm:$0xff]
    %v95 = vld [vmem:[#allocation2 + $0x1f8] sm:$0xff]
    %v96 = vld [vmem:[#allocation2 + $0x200] sm:$0xff]
    %v97 = vld [vmem:[#allocation2 + $0x208] sm:$0xff]
    %v98 = vld [vmem:[#allocation2 + $0x210] sm:$0xff]
    %v99 = vld [vmem:[#allocation2 + $0x218] sm:$0xff]
    %v100 = vld [vmem:[#allocation2 + $0x220] sm:$0xff]
    %v101 = vld [vmem:[#allocation2 + $0x228] sm:$0xff]
    %v102 = vld [vmem:[#allocation2 + $0x230] sm:$0xff]
    %v103 = vld [vmem:[#allocation2 + $0x238] sm:$0xff]
    %v104 = vld [vmem:[#allocation2 + $0x240] sm:$0xff]
    %v105 = vld [vmem:[#allocation2 + $0x248] sm:$0xff]
    %v106 = vld [vmem:[#allocation2 + $0x250] sm:$0xff]
    %v107 = vld [vmem:[#allocation2 + $0x258] sm:$0xff]
    %v108 = vld [vmem:[#allocation2 + $0x260] sm:$0xff]
    %v109 = vld [vmem:[#allocation2 + $0x268] sm:$0xff]
    %v110 = vld [vmem:[#allocation2 + $0x270] sm:$0xff]
    %v111 = vld [vmem:[#allocation2 + $0x278] sm:$0xff]
    %v112 = vld [vmem:[#allocation2 + $0x280] sm:$0xff]
    %v113 = vld [vmem:[#allocation2 + $0x288] sm:$0xff]
    %v114 = vld [vmem:[#allocation2 + $0x290] sm:$0xff]
    %v115 = vld [vmem:[#allocation2 + $0x298] sm:$0xff]
    %v116 = vld [vmem:[#allocation2 + $0x2a0] sm:$0xff]
    %v117 = vld [vmem:[#allocation2 + $0x2a8] sm:$0xff]
    %v118 = vld [vmem:[#allocation2 + $0x2b0] sm:$0xff]
    %v119 = vld [vmem:[#allocation2 + $0x2b8] sm:$0xff]
    %v120 = vld [vmem:[#allocation2 + $0x2c0] sm:$0xff]
    %v121 = vld [vmem:[#allocation2 + $0x2c8] sm:$0xff]
    %v122 = vld [vmem:[#allocation2 + $0x2d0] sm:$0xff]
    %v123 = vld [vmem:[#allocation2 + $0x2d8] sm:$0xff]
    %v124 = vld [vmem:[#allocation2 + $0x2e0] sm:$0xff]
    %v125 = vld [vmem:[#allocation2 + $0x2e8] sm:$0xff]
    %v126 = vld [vmem:[#allocation2 + $0x2f0] sm:$0xff]
    %v127 = vld [vmem:[#allocation2 + $0x2f8] sm:$0xff]
    %v128 = vld [vmem:[#allocation2 + $0x300] sm:$0xff]
    %v129 = vld [vmem:[#allocation2 + $0x308] sm:$0xff]
    %v130 = vld [vmem:[#allocation2 + $0x310] sm:$0xff]
    %v131 = vld [vmem:[#allocation2 + $0x318] sm:$0xff]
    %v132 = vld [vmem:[#allocation2 + $0x320] sm:$0xff]
    %v133 = vld [vmem:[#allocation2 + $0x328] sm:$0xff]
    %v134 = vld [vmem:[#allocation2 + $0x330] sm:$0xff]
    %v135 = vld [vmem:[#allocation2 + $0x338] sm:$0xff]
    %v136 = vld [vmem:[#allocation2 + $0x340] sm:$0xff]
    %v137 = vld [vmem:[#allocation2 + $0x348] sm:$0xff]
    %v138 = vld [vmem:[#allocation2 + $0x350] sm:$0xff]
    %v139 = vld [vmem:[#allocation2 + $0x358] sm:$0xff]
    %v140 = vld [vmem:[#allocation2 + $0x360] sm:$0xff]
    %v141 = vld [vmem:[#allocation2 + $0x368] sm:$0xff]
    %v142 = vld [vmem:[#allocation2 + $0x370] sm:$0xff]
    %v143 = vld [vmem:[#allocation2 + $0x378] sm:$0xff]
    %v144 = vld [vmem:[#allocation2 + $0x380] sm:$0xff]
    %v145 = vld [vmem:[#allocation2 + $0x388] sm:$0xff]
    %v146 = vld [vmem:[#allocation2 + $0x390] sm:$0xff]
    %v147 = vld [vmem:[#allocation2 + $0x398] sm:$0xff]
    %v148 = vld [vmem:[#allocation2 + $0x3a0] sm:$0xff]
    %v149 = vld [vmem:[#allocation2 + $0x3a8] sm:$0xff]
    %v150 = vld [vmem:[#allocation2 + $0x3b0] sm:$0xff]
    %v151 = vld [vmem:[#allocation2 + $0x3b8] sm:$0xff]
    %v152 = vld [vmem:[#allocation2 + $0x3c0] sm:$0xff]
    %v153 = vld [vmem:[#allocation2 + $0x3c8] sm:$0xff]
    %v154 = vld [vmem:[#allocation2 + $0x3d0] sm:$0xff]
    %v155 = vld [vmem:[#allocation2 + $0x3d8] sm:$0xff]
    %v156 = vld [vmem:[#allocation2 + $0x3e0] sm:$0xff]
    %v157 = vld [vmem:[#allocation2 + $0x3e8] sm:$0xff]
    %v158 = vld [vmem:[#allocation2 + $0x3f0] sm:$0xff]
    %v159 = vld [vmem:[#allocation2 + $0x3f8] sm:$0xff]
    %v160 = vld [vmem:[%s2] sm:$0x3]
    %v162 = vperm.slane %v31, 0
    %v163 = vperm.slane %v31, 1
    %v164 = vperm.slane %v31, 2
    %v165 = vperm.slane %v31, 3
    %v171 = vperm.slane %v160, 0
    %v172 = vperm.slane %v160, 1
    %v175 = vand.u32 %v62, 4294901760
    %176 = vmatpush.msra.mxu0 %v175
    %v177 = vand.u32 %v60, 4294901760
    %178 = vmatpush.msra.mxu0 %v177
    %v179 = vand.u32 %v58, 4294901760
    %180 = vmatpush.msra.mxu0 %v179
    %v181 = vand.u32 %v56, 4294901760
    %182 = vmatpush.msra.mxu0 %v181
    %v183 = vand.u32 %v54, 4294901760
    %184 = vmatpush.msra.mxu0 %v183
    %v185 = vand.u32 %v52, 4294901760
    %186 = vmatpush.msra.mxu0 %v185
    %v187 = vand.u32 %v50, 4294901760
    %188 = vmatpush.msra.mxu0 %v187
    %v189 = vand.u32 %v48, 4294901760
    %190 = vmatpush.msra.mxu0 %v189
    %v191 = vand.u32 %v46, 4294901760
    %192 = vmatpush.msra.mxu0 %v191
    %v193 = vand.u32 %v44, 4294901760
    %194 = vmatpush.msra.mxu0 %v193
    %v195 = vand.u32 %v42, 4294901760
    %196 = vmatpush.msra.mxu0 %v195
    %v197 = vand.u32 %v40, 4294901760
    %198 = vmatpush.msra.mxu0 %v197
    %v199 = vand.u32 %v38, 4294901760
    %200 = vmatpush.msra.mxu0 %v199
    %v201 = vand.u32 %v36, 4294901760
    %202 = vmatpush.msra.mxu0 %v201
    %v203 = vand.u32 %v34, 4294901760
    %204 = vmatpush.msra.mxu0 %v203
    %v205 = vand.u32 %v32, 4294901760
    %206 = vmatpush.msra.mxu0 %v205
    %v207 = vand.u32 %v162, 4294901760
    %v208 = vsub.f32 %v162, %v207
    %v209 = vand.u32 %v208, 4294901760
    %v210 = vsub.f32 %v208, %v209
    %v211 = vand.u32 %v210, 4294901760
    %212 = vmatmul.f32.gmra.mxu0 %v211
    %v213 = vpop.f32.mrf.mxu0
    %v214 = vadd.f32 %v171, %v213
    %215 = vdwg.mxu0
    %v216 = vand.u32 %v62, 4294901760
    %v217 = vsub.f32 %v62, %v216
    %v218 = vand.u32 %v217, 4294901760
    %v219 = vsub.f32 %v217, %v218
    %v220 = vand.u32 %v219, 4294901760
    %221 = vmatpush.msra.mxu0 %v220
    %v222 = vand.u32 %v60, 4294901760
    %v223 = vsub.f32 %v60, %v222
    %v224 = vand.u32 %v223, 4294901760
    %v225 = vsub.f32 %v223, %v224
    %v226 = vand.u32 %v225, 4294901760
    %227 = vmatpush.msra.mxu0 %v226
    %v228 = vand.u32 %v58, 4294901760
    %v229 = vsub.f32 %v58, %v228
    %v230 = vand.u32 %v229, 4294901760
    %v231 = vsub.f32 %v229, %v230
    %v232 = vand.u32 %v231, 4294901760
    %233 = vmatpush.msra.mxu0 %v232
    %v234 = vand.u32 %v56, 4294901760
    %v235 = vsub.f32 %v56, %v234
    %v236 = vand.u32 %v235, 4294901760
    %v237 = vsub.f32 %v235, %v236
    %v238 = vand.u32 %v237, 4294901760
    %239 = vmatpush.msra.mxu0 %v238
    %v240 = vand.u32 %v54, 4294901760
    %v241 = vsub.f32 %v54, %v240
    %v242 = vand.u32 %v241, 4294901760
    %v243 = vsub.f32 %v241, %v242
    %v244 = vand.u32 %v243, 4294901760
    %245 = vmatpush.msra.mxu0 %v244
    %v246 = vand.u32 %v52, 4294901760
    %v247 = vsub.f32 %v52, %v246
    %v248 = vand.u32 %v247, 4294901760
    %v249 = vsub.f32 %v247, %v248
    %v250 = vand.u32 %v249, 4294901760
    %251 = vmatpush.msra.mxu0 %v250
    %v252 = vand.u32 %v50, 4294901760
    %v253 = vsub.f32 %v50, %v252
    %v254 = vand.u32 %v253, 4294901760
    %v255 = vsub.f32 %v253, %v254
    %v256 = vand.u32 %v255, 4294901760
    %257 = vmatpush.msra.mxu0 %v256
    %v258 = vand.u32 %v48, 4294901760
    %v259 = vsub.f32 %v48, %v258
    %v260 = vand.u32 %v259, 4294901760
    %v261 = vsub.f32 %v259, %v260
    %v262 = vand.u32 %v261, 4294901760
    %263 = vmatpush.msra.mxu0 %v262
    %v264 = vand.u32 %v46, 4294901760
    %v265 = vsub.f32 %v46, %v264
    %v266 = vand.u32 %v265, 4294901760
    %v267 = vsub.f32 %v265, %v266
    %v268 = vand.u32 %v267, 4294901760
    %269 = vmatpush.msra.mxu0 %v268
    %v270 = vand.u32 %v44, 4294901760
    %v271 = vsub.f32 %v44, %v270
    %v272 = vand.u32 %v271, 4294901760
    %v273 = vsub.f32 %v271, %v272
    %v274 = vand.u32 %v273, 4294901760
    %275 = vmatpush.msra.mxu0 %v274
    %v276 = vand.u32 %v42, 4294901760
    %v277 = vsub.f32 %v42, %v276
    %v278 = vand.u32 %v277, 4294901760
    %v279 = vsub.f32 %v277, %v278
    %v280 = vand.u32 %v279, 4294901760
    %281 = vmatpush.msra.mxu0 %v280
    %v282 = vand.u32 %v40, 4294901760
    %v283 = vsub.f32 %v40, %v282
    %v284 = vand.u32 %v283, 4294901760
    %v285 = vsub.f32 %v283, %v284
    %v286 = vand.u32 %v285, 4294901760
    %287 = vmatpush.msra.mxu0 %v286
    %v288 = vand.u32 %v38, 4294901760
    %v289 = vsub.f32 %v38, %v288
    %v290 = vand.u32 %v289, 4294901760
    %v291 = vsub.f32 %v289, %v290
    %v292 = vand.u32 %v291, 4294901760
    %293 = vmatpush.msra.mxu0 %v292
    %v294 = vand.u32 %v36, 4294901760
    %v295 = vsub.f32 %v36, %v294
    %v296 = vand.u32 %v295, 4294901760
    %v297 = vsub.f32 %v295, %v296
    %v298 = vand.u32 %v297, 4294901760
    %299 = vmatpush.msra.mxu0 %v298
    %v300 = vand.u32 %v34, 4294901760
    %v301 = vsub.f32 %v34, %v300
    %v302 = vand.u32 %v301, 4294901760
    %v303 = vsub.f32 %v301, %v302
    %v304 = vand.u32 %v303, 4294901760
    %305 = vmatpush.msra.mxu0 %v304
    %v306 = vand.u32 %v32, 4294901760
    %v307 = vsub.f32 %v32, %v306
    %v308 = vand.u32 %v307, 4294901760
    %v309 = vsub.f32 %v307, %v308
    %v310 = vand.u32 %v309, 4294901760
    %311 = vmatpush.msra.mxu0 %v310
    %v312 = vand.u32 %v162, 4294901760
    %313 = vmatmul.f32.gmra.mxu0 %v312
    %v314 = vpop.f32.mrf.mxu0
    %v315 = vadd.f32 %v214, %v314
    %316 = vdwg.mxu0
    %v317 = vand.u32 %v62, 4294901760
    %v318 = vsub.f32 %v62, %v317
    %319 = vmatpush.msra.mxu0 %v318
    %v320 = vand.u32 %v60, 4294901760
    %v321 = vsub.f32 %v60, %v320
    %322 = vmatpush.msra.mxu0 %v321
    %v323 = vand.u32 %v58, 4294901760
    %v324 = vsub.f32 %v58, %v323
    %325 = vmatpush.msra.mxu0 %v324
    %v326 = vand.u32 %v56, 4294901760
    %v327 = vsub.f32 %v56, %v326
    %328 = vmatpush.msra.mxu0 %v327
    %v329 = vand.u32 %v54, 4294901760
    %v330 = vsub.f32 %v54, %v329
    %331 = vmatpush.msra.mxu0 %v330
    %v332 = vand.u32 %v52, 4294901760
    %v333 = vsub.f32 %v52, %v332
    %334 = vmatpush.msra.mxu0 %v333
    %v335 = vand.u32 %v50, 4294901760
    %v336 = vsub.f32 %v50, %v335
    %337 = vmatpush.msra.mxu0 %v336
    %v338 = vand.u32 %v48, 4294901760
    %v339 = vsub.f32 %v48, %v338
    %340 = vmatpush.msra.mxu0 %v339
    %v341 = vand.u32 %v46, 4294901760
    %v342 = vsub.f32 %v46, %v341
    %343 = vmatpush.msra.mxu0 %v342
    %v344 = vand.u32 %v44, 4294901760
    %v345 = vsub.f32 %v44, %v344
    %346 = vmatpush.msra.mxu0 %v345
    %v347 = vand.u32 %v42, 4294901760
    %v348 = vsub.f32 %v42, %v347
    %349 = vmatpush.msra.mxu0 %v348
    %v350 = vand.u32 %v40, 4294901760
    %v351 = vsub.f32 %v40, %v350
    %352 = vmatpush.msra.mxu0 %v351
    %v353 = vand.u32 %v38, 4294901760
    %v354 = vsub.f32 %v38, %v353
    %355 = vmatpush.msra.mxu0 %v354
    %v356 = vand.u32 %v36, 4294901760
    %v357 = vsub.f32 %v36, %v356
    %358 = vmatpush.msra.mxu0 %v357
    %v359 = vand.u32 %v34, 4294901760
    %v360 = vsub.f32 %v34, %v359
    %361 = vmatpush.msra.mxu0 %v360
    %v362 = vand.u32 %v32, 4294901760
    %v363 = vsub.f32 %v32, %v362
    %364 = vmatpush.msra.mxu0 %v363
    %v365 = vand.u32 %v162, 4294901760
    %v366 = vsub.f32 %v162, %v365
    %367 = vmatmul.f32.gmra.mxu0 %v366
    %v368 = vpop.f32.mrf.mxu0
    %v369 = vadd.f32 %v315, %v368
    %370 = vdwg.mxu0
    %v371 = vand.u32 %v62, 4294901760
    %372 = vmatpush.msra.mxu0 %v371
    %v373 = vand.u32 %v60, 4294901760
    %374 = vmatpush.msra.mxu0 %v373
    %v375 = vand.u32 %v58, 4294901760
    %376 = vmatpush.msra.mxu0 %v375
    %v377 = vand.u32 %v56, 4294901760
    %378 = vmatpush.msra.mxu0 %v377
    %v379 = vand.u32 %v54, 4294901760
    %380 = vmatpush.msra.mxu0 %v379
    %v381 = vand.u32 %v52, 4294901760
    %382 = vmatpush.msra.mxu0 %v381
    %v383 = vand.u32 %v50, 4294901760
    %384 = vmatpush.msra.mxu0 %v383
    %v385 = vand.u32 %v48, 4294901760
    %386 = vmatpush.msra.mxu0 %v385
    %v387 = vand.u32 %v46, 4294901760
    %388 = vmatpush.msra.mxu0 %v387
    %v389 = vand.u32 %v44, 4294901760
    %390 = vmatpush.msra.mxu0 %v389
    %v391 = vand.u32 %v42, 4294901760
    %392 = vmatpush.msra.mxu0 %v391
    %v393 = vand.u32 %v40, 4294901760
    %394 = vmatpush.msra.mxu0 %v393
    %v395 = vand.u32 %v38, 4294901760
    %396 = vmatpush.msra.mxu0 %v395
    %v397 = vand.u32 %v36, 4294901760
    %398 = vmatpush.msra.mxu0 %v397
    %v399 = vand.u32 %v34, 4294901760
    %400 = vmatpush.msra.mxu0 %v399
    %v401 = vand.u32 %v32, 4294901760
    %402 = vmatpush.msra.mxu0 %v401
    %v403 = vand.u32 %v162, 4294901760
    %v404 = vsub.f32 %v162, %v403
    %v405 = vand.u32 %v404, 4294901760
    %406 = vmatmul.f32.gmra.mxu0 %v405
    %v407 = vpop.f32.mrf.mxu0
    %v408 = vadd.f32 %v369, %v407
    %409 = vdwg.mxu0
    %v410 = vand.u32 %v62, 4294901760
    %v411 = vsub.f32 %v62, %v410
    %v412 = vand.u32 %v411, 4294901760
    %413 = vmatpush.msra.mxu0 %v412
    %v414 = vand.u32 %v60, 4294901760
    %v415 = vsub.f32 %v60, %v414
    %v416 = vand.u32 %v415, 4294901760
    %417 = vmatpush.msra.mxu0 %v416
    %v418 = vand.u32 %v58, 4294901760
    %v419 = vsub.f32 %v58, %v418
    %v420 = vand.u32 %v419, 4294901760
    %421 = vmatpush.msra.mxu0 %v420
    %v422 = vand.u32 %v56, 4294901760
    %v423 = vsub.f32 %v56, %v422
    %v424 = vand.u32 %v423, 4294901760
    %425 = vmatpush.msra.mxu0 %v424
    %v426 = vand.u32 %v54, 4294901760
    %v427 = vsub.f32 %v54, %v426
    %v428 = vand.u32 %v427, 4294901760
    %429 = vmatpush.msra.mxu0 %v428
    %v430 = vand.u32 %v52, 4294901760
    %v431 = vsub.f32 %v52, %v430
    %v432 = vand.u32 %v431, 4294901760
    %433 = vmatpush.msra.mxu0 %v432
    %v434 = vand.u32 %v50, 4294901760
    %v435 = vsub.f32 %v50, %v434
    %v436 = vand.u32 %v435, 4294901760
    %437 = vmatpush.msra.mxu0 %v436
    %v438 = vand.u32 %v48, 4294901760
    %v439 = vsub.f32 %v48, %v438
    %v440 = vand.u32 %v439, 4294901760
    %441 = vmatpush.msra.mxu0 %v440
    %v442 = vand.u32 %v46, 4294901760
    %v443 = vsub.f32 %v46, %v442
    %v444 = vand.u32 %v443, 4294901760
    %445 = vmatpush.msra.mxu0 %v444
    %v446 = vand.u32 %v44, 4294901760
    %v447 = vsub.f32 %v44, %v446
    %v448 = vand.u32 %v447, 4294901760
    %449 = vmatpush.msra.mxu0 %v448
    %v450 = vand.u32 %v42, 4294901760
    %v451 = vsub.f32 %v42, %v450
    %v452 = vand.u32 %v451, 4294901760
    %453 = vmatpush.msra.mxu0 %v452
    %v454 = vand.u32 %v40, 4294901760
    %v455 = vsub.f32 %v40, %v454
    %v456 = vand.u32 %v455, 4294901760
    %457 = vmatpush.msra.mxu0 %v456
    %v458 = vand.u32 %v38, 4294901760
    %v459 = vsub.f32 %v38, %v458
    %v460 = vand.u32 %v459, 4294901760
    %461 = vmatpush.msra.mxu0 %v460
    %v462 = vand.u32 %v36, 4294901760
    %v463 = vsub.f32 %v36, %v462
    %v464 = vand.u32 %v463, 4294901760
    %465 = vmatpush.msra.mxu0 %v464
    %v466 = vand.u32 %v34, 4294901760
    %v467 = vsub.f32 %v34, %v466
    %v468 = vand.u32 %v467, 4294901760
    %469 = vmatpush.msra.mxu0 %v468
    %v470 = vand.u32 %v32, 4294901760
    %v471 = vsub.f32 %v32, %v470
    %v472 = vand.u32 %v471, 4294901760
    %473 = vmatpush.msra.mxu0 %v472
    %v474 = vand.u32 %v162, 4294901760
    %475 = vmatmul.f32.gmra.mxu0 %v474
    %v476 = vpop.f32.mrf.mxu0
    %v477 = vadd.f32 %v408, %v476
    %478 = vdwg.mxu0
    %v479 = vand.u32 %v62, 4294901760
    %480 = vmatpush.msra.mxu0 %v479
    %v481 = vand.u32 %v60, 4294901760
    %482 = vmatpush.msra.mxu0 %v481
    %v483 = vand.u32 %v58, 4294901760
    %484 = vmatpush.msra.mxu0 %v483
    %v485 = vand.u32 %v56, 4294901760
    %486 = vmatpush.msra.mxu0 %v485
    %v487 = vand.u32 %v54, 4294901760
    %488 = vmatpush.msra.mxu0 %v487
    %v489 = vand.u32 %v52, 4294901760
    %490 = vmatpush.msra.mxu0 %v489
    %v491 = vand.u32 %v50, 4294901760
    %492 = vmatpush.msra.mxu0 %v491
    %v493 = vand.u32 %v48, 4294901760
    %494 = vmatpush.msra.mxu0 %v493
    %v495 = vand.u32 %v46, 4294901760
    %496 = vmatpush.msra.mxu0 %v495
    %v497 = vand.u32 %v44, 4294901760
    %498 = vmatpush.msra.mxu0 %v497
    %v499 = vand.u32 %v42, 4294901760
    %500 = vmatpush.msra.mxu0 %v499
    %v501 = vand.u32 %v40, 4294901760
    %502 = vmatpush.msra.mxu0 %v501
    %v503 = vand.u32 %v38, 4294901760
    %504 = vmatpush.msra.mxu0 %v503
    %v505 = vand.u32 %v36, 4294901760
    %506 = vmatpush.msra.mxu0 %v505
    %v507 = vand.u32 %v34, 4294901760
    %508 = vmatpush.msra.mxu0 %v507
    %v509 = vand.u32 %v32, 4294901760
    %510 = vmatpush.msra.mxu0 %v509
    %v511 = vand.u32 %v162, 4294901760
    %512 = vmatmul.f32.gmra.mxu0 %v511
    %v513 = vpop.f32.mrf.mxu0
    %v514 = vadd.f32 %v477, %v513
    %515 = vdwg.mxu0
    %v516 = vand.u32 %v94, 4294901760
    %517 = vmatpush.msra.mxu0 %v516
    %v518 = vand.u32 %v92, 4294901760
    %519 = vmatpush.msra.mxu0 %v518
    %v520 = vand.u32 %v90, 4294901760
    %521 = vmatpush.msra.mxu0 %v520
    %v522 = vand.u32 %v88, 4294901760
    %523 = vmatpush.msra.mxu0 %v522
    %v524 = vand.u32 %v86, 4294901760
    %525 = vmatpush.msra.mxu0 %v524
    %v526 = vand.u32 %v84, 4294901760
    %527 = vmatpush.msra.mxu0 %v526
    %v528 = vand.u32 %v82, 4294901760
    %529 = vmatpush.msra.mxu0 %v528
    %v530 = vand.u32 %v80, 4294901760
    %531 = vmatpush.msra.mxu0 %v530
    %v532 = vand.u32 %v78, 4294901760
    %533 = vmatpush.msra.mxu0 %v532
    %v534 = vand.u32 %v76, 4294901760
    %535 = vmatpush.msra.mxu0 %v534
    %v536 = vand.u32 %v74, 4294901760
    %537 = vmatpush.msra.mxu0 %v536
    %v538 = vand.u32 %v72, 4294901760
    %539 = vmatpush.msra.mxu0 %v538
    %v540 = vand.u32 %v70, 4294901760
    %541 = vmatpush.msra.mxu0 %v540
    %v542 = vand.u32 %v68, 4294901760
    %543 = vmatpush.msra.mxu0 %v542
    %v544 = vand.u32 %v66, 4294901760
    %545 = vmatpush.msra.mxu0 %v544
    %v546 = vand.u32 %v64, 4294901760
    %547 = vmatpush.msra.mxu0 %v546
    %v548 = vand.u32 %v163, 4294901760
    %v549 = vsub.f32 %v163, %v548
    %v550 = vand.u32 %v549, 4294901760
    %v551 = vsub.f32 %v549, %v550
    %v552 = vand.u32 %v551, 4294901760
    %553 = vmatmul.f32.gmra.mxu0 %v552
    %v554 = vpop.f32.mrf.mxu0
    %v555 = vadd.f32 %v514, %v554
    %556 = vdwg.mxu0
    %v557 = vand.u32 %v94, 4294901760
    %v558 = vsub.f32 %v94, %v557
    %v559 = vand.u32 %v558, 4294901760
    %v560 = vsub.f32 %v558, %v559
    %v561 = vand.u32 %v560, 4294901760
    %562 = vmatpush.msra.mxu0 %v561
    %v563 = vand.u32 %v92, 4294901760
    %v564 = vsub.f32 %v92, %v563
    %v565 = vand.u32 %v564, 4294901760
    %v566 = vsub.f32 %v564, %v565
    %v567 = vand.u32 %v566, 4294901760
    %568 = vmatpush.msra.mxu0 %v567
    %v569 = vand.u32 %v90, 4294901760
    %v570 = vsub.f32 %v90, %v569
    %v571 = vand.u32 %v570, 4294901760
    %v572 = vsub.f32 %v570, %v571
    %v573 = vand.u32 %v572, 4294901760
    %574 = vmatpush.msra.mxu0 %v573
    %v575 = vand.u32 %v88, 4294901760
    %v576 = vsub.f32 %v88, %v575
    %v577 = vand.u32 %v576, 4294901760
    %v578 = vsub.f32 %v576, %v577
    %v579 = vand.u32 %v578, 4294901760
    %580 = vmatpush.msra.mxu0 %v579
    %v581 = vand.u32 %v86, 4294901760
    %v582 = vsub.f32 %v86, %v581
    %v583 = vand.u32 %v582, 4294901760
    %v584 = vsub.f32 %v582, %v583
    %v585 = vand.u32 %v584, 4294901760
    %586 = vmatpush.msra.mxu0 %v585
    %v587 = vand.u32 %v84, 4294901760
    %v588 = vsub.f32 %v84, %v587
    %v589 = vand.u32 %v588, 4294901760
    %v590 = vsub.f32 %v588, %v589
    %v591 = vand.u32 %v590, 4294901760
    %592 = vmatpush.msra.mxu0 %v591
    %v593 = vand.u32 %v82, 4294901760
    %v594 = vsub.f32 %v82, %v593
    %v595 = vand.u32 %v594, 4294901760
    %v596 = vsub.f32 %v594, %v595
    %v597 = vand.u32 %v596, 4294901760
    %598 = vmatpush.msra.mxu0 %v597
    %v599 = vand.u32 %v80, 4294901760
    %v600 = vsub.f32 %v80, %v599
    %v601 = vand.u32 %v600, 4294901760
    %v602 = vsub.f32 %v600, %v601
    %v603 = vand.u32 %v602, 4294901760
    %604 = vmatpush.msra.mxu0 %v603
    %v605 = vand.u32 %v78, 4294901760
    %v606 = vsub.f32 %v78, %v605
    %v607 = vand.u32 %v606, 4294901760
    %v608 = vsub.f32 %v606, %v607
    %v609 = vand.u32 %v608, 4294901760
    %610 = vmatpush.msra.mxu0 %v609
    %v611 = vand.u32 %v76, 4294901760
    %v612 = vsub.f32 %v76, %v611
    %v613 = vand.u32 %v612, 4294901760
    %v614 = vsub.f32 %v612, %v613
    %v615 = vand.u32 %v614, 4294901760
    %616 = vmatpush.msra.mxu0 %v615
    %v617 = vand.u32 %v74, 4294901760
    %v618 = vsub.f32 %v74, %v617
    %v619 = vand.u32 %v618, 4294901760
    %v620 = vsub.f32 %v618, %v619
    %v621 = vand.u32 %v620, 4294901760
    %622 = vmatpush.msra.mxu0 %v621
    %v623 = vand.u32 %v72, 4294901760
    %v624 = vsub.f32 %v72, %v623
    %v625 = vand.u32 %v624, 4294901760
    %v626 = vsub.f32 %v624, %v625
    %v627 = vand.u32 %v626, 4294901760
    %628 = vmatpush.msra.mxu0 %v627
    %v629 = vand.u32 %v70, 4294901760
    %v630 = vsub.f32 %v70, %v629
    %v631 = vand.u32 %v630, 4294901760
    %v632 = vsub.f32 %v630, %v631
    %v633 = vand.u32 %v632, 4294901760
    %634 = vmatpush.msra.mxu0 %v633
    %v635 = vand.u32 %v68, 4294901760
    %v636 = vsub.f32 %v68, %v635
    %v637 = vand.u32 %v636, 4294901760
    %v638 = vsub.f32 %v636, %v637
    %v639 = vand.u32 %v638, 4294901760
    %640 = vmatpush.msra.mxu0 %v639
    %v641 = vand.u32 %v66, 4294901760
    %v642 = vsub.f32 %v66, %v641
    %v643 = vand.u32 %v642, 4294901760
    %v644 = vsub.f32 %v642, %v643
    %v645 = vand.u32 %v644, 4294901760
    %646 = vmatpush.msra.mxu0 %v645
    %v647 = vand.u32 %v64, 4294901760
    %v648 = vsub.f32 %v64, %v647
    %v649 = vand.u32 %v648, 4294901760
    %v650 = vsub.f32 %v648, %v649
    %v651 = vand.u32 %v650, 4294901760
    %652 = vmatpush.msra.mxu0 %v651
    %v653 = vand.u32 %v163, 4294901760
    %654 = vmatmul.f32.gmra.mxu0 %v653
    %v655 = vpop.f32.mrf.mxu0
    %v656 = vadd.f32 %v555, %v655
    %657 = vdwg.mxu0
    %v658 = vand.u32 %v94, 4294901760
    %v659 = vsub.f32 %v94, %v658
    %660 = vmatpush.msra.mxu0 %v659
    %v661 = vand.u32 %v92, 4294901760
    %v662 = vsub.f32 %v92, %v661
    %663 = vmatpush.msra.mxu0 %v662
    %v664 = vand.u32 %v90, 4294901760
    %v665 = vsub.f32 %v90, %v664
    %666 = vmatpush.msra.mxu0 %v665
    %v667 = vand.u32 %v88, 4294901760
    %v668 = vsub.f32 %v88, %v667
    %669 = vmatpush.msra.mxu0 %v668
    %v670 = vand.u32 %v86, 4294901760
    %v671 = vsub.f32 %v86, %v670
    %672 = vmatpush.msra.mxu0 %v671
    %v673 = vand.u32 %v84, 4294901760
    %v674 = vsub.f32 %v84, %v673
    %675 = vmatpush.msra.mxu0 %v674
    %v676 = vand.u32 %v82, 4294901760
    %v677 = vsub.f32 %v82, %v676
    %678 = vmatpush.msra.mxu0 %v677
    %v679 = vand.u32 %v80, 4294901760
    %v680 = vsub.f32 %v80, %v679
    %681 = vmatpush.msra.mxu0 %v680
    %v682 = vand.u32 %v78, 4294901760
    %v683 = vsub.f32 %v78, %v682
    %684 = vmatpush.msra.mxu0 %v683
    %v685 = vand.u32 %v76, 4294901760
    %v686 = vsub.f32 %v76, %v685
    %687 = vmatpush.msra.mxu0 %v686
    %v688 = vand.u32 %v74, 4294901760
    %v689 = vsub.f32 %v74, %v688
    %690 = vmatpush.msra.mxu0 %v689
    %v691 = vand.u32 %v72, 4294901760
    %v692 = vsub.f32 %v72, %v691
    %693 = vmatpush.msra.mxu0 %v692
    %v694 = vand.u32 %v70, 4294901760
    %v695 = vsub.f32 %v70, %v694
    %696 = vmatpush.msra.mxu0 %v695
    %v697 = vand.u32 %v68, 4294901760
    %v698 = vsub.f32 %v68, %v697
    %699 = vmatpush.msra.mxu0 %v698
    %v700 = vand.u32 %v66, 4294901760
    %v701 = vsub.f32 %v66, %v700
    %702 = vmatpush.msra.mxu0 %v701
    %v703 = vand.u32 %v64, 4294901760
    %v704 = vsub.f32 %v64, %v703
    %705 = vmatpush.msra.mxu0 %v704
    %v706 = vand.u32 %v163, 4294901760
    %v707 = vsub.f32 %v163, %v706
    %708 = vmatmul.f32.gmra.mxu0 %v707
    %v709 = vpop.f32.mrf.mxu0
    %v710 = vadd.f32 %v656, %v709
    %711 = vdwg.mxu0
    %v712 = vand.u32 %v94, 4294901760
    %713 = vmatpush.msra.mxu0 %v712
    %v714 = vand.u32 %v92, 4294901760
    %715 = vmatpush.msra.mxu0 %v714
    %v716 = vand.u32 %v90, 4294901760
    %717 = vmatpush.msra.mxu0 %v716
    %v718 = vand.u32 %v88, 4294901760
    %719 = vmatpush.msra.mxu0 %v718
    %v720 = vand.u32 %v86, 4294901760
    %721 = vmatpush.msra.mxu0 %v720
    %v722 = vand.u32 %v84, 4294901760
    %723 = vmatpush.msra.mxu0 %v722
    %v724 = vand.u32 %v82, 4294901760
    %725 = vmatpush.msra.mxu0 %v724
    %v726 = vand.u32 %v80, 4294901760
    %727 = vmatpush.msra.mxu0 %v726
    %v728 = vand.u32 %v78, 4294901760
    %729 = vmatpush.msra.mxu0 %v728
    %v730 = vand.u32 %v76, 4294901760
    %731 = vmatpush.msra.mxu0 %v730
    %v732 = vand.u32 %v74, 4294901760
    %733 = vmatpush.msra.mxu0 %v732
    %v734 = vand.u32 %v72, 4294901760
    %735 = vmatpush.msra.mxu0 %v734
    %v736 = vand.u32 %v70, 4294901760
    %737 = vmatpush.msra.mxu0 %v736
    %v738 = vand.u32 %v68, 4294901760
    %739 = vmatpush.msra.mxu0 %v738
    %v740 = vand.u32 %v66, 4294901760
    %741 = vmatpush.msra.mxu0 %v740
    %v742 = vand.u32 %v64, 4294901760
    %743 = vmatpush.msra.mxu0 %v742
    %v744 = vand.u32 %v163, 4294901760
    %v745 = vsub.f32 %v163, %v744
    %v746 = vand.u32 %v745, 4294901760
    %747 = vmatmul.f32.gmra.mxu0 %v746
    %v748 = vpop.f32.mrf.mxu0
    %v749 = vadd.f32 %v710, %v748
    %750 = vdwg.mxu0
    %v751 = vand.u32 %v94, 4294901760
    %v752 = vsub.f32 %v94, %v751
    %v753 = vand.u32 %v752, 4294901760
    %754 = vmatpush.msra.mxu0 %v753
    %v755 = vand.u32 %v92, 4294901760
    %v756 = vsub.f32 %v92, %v755
    %v757 = vand.u32 %v756, 4294901760
    %758 = vmatpush.msra.mxu0 %v757
    %v759 = vand.u32 %v90, 4294901760
    %v760 = vsub.f32 %v90, %v759
    %v761 = vand.u32 %v760, 4294901760
    %762 = vmatpush.msra.mxu0 %v761
    %v763 = vand.u32 %v88, 4294901760
    %v764 = vsub.f32 %v88, %v763
    %v765 = vand.u32 %v764, 4294901760
    %766 = vmatpush.msra.mxu0 %v765
    %v767 = vand.u32 %v86, 4294901760
    %v768 = vsub.f32 %v86, %v767
    %v769 = vand.u32 %v768, 4294901760
    %770 = vmatpush.msra.mxu0 %v769
    %v771 = vand.u32 %v84, 4294901760
    %v772 = vsub.f32 %v84, %v771
    %v773 = vand.u32 %v772, 4294901760
    %774 = vmatpush.msra.mxu0 %v773
    %v775 = vand.u32 %v82, 4294901760
    %v776 = vsub.f32 %v82, %v775
    %v777 = vand.u32 %v776, 4294901760
    %778 = vmatpush.msra.mxu0 %v777
    %v779 = vand.u32 %v80, 4294901760
    %v780 = vsub.f32 %v80, %v779
    %v781 = vand.u32 %v780, 4294901760
    %782 = vmatpush.msra.mxu0 %v781
    %v783 = vand.u32 %v78, 4294901760
    %v784 = vsub.f32 %v78, %v783
    %v785 = vand.u32 %v784, 4294901760
    %786 = vmatpush.msra.mxu0 %v785
    %v787 = vand.u32 %v76, 4294901760
    %v788 = vsub.f32 %v76, %v787
    %v789 = vand.u32 %v788, 4294901760
    %790 = vmatpush.msra.mxu0 %v789
    %v791 = vand.u32 %v74, 4294901760
    %v792 = vsub.f32 %v74, %v791
    %v793 = vand.u32 %v792, 4294901760
    %794 = vmatpush.msra.mxu0 %v793
    %v795 = vand.u32 %v72, 4294901760
    %v796 = vsub.f32 %v72, %v795
    %v797 = vand.u32 %v796, 4294901760
    %798 = vmatpush.msra.mxu0 %v797
    %v799 = vand.u32 %v70, 4294901760
    %v800 = vsub.f32 %v70, %v799
    %v801 = vand.u32 %v800, 4294901760
    %802 = vmatpush.msra.mxu0 %v801
    %v803 = vand.u32 %v68, 4294901760
    %v804 = vsub.f32 %v68, %v803
    %v805 = vand.u32 %v804, 4294901760
    %806 = vmatpush.msra.mxu0 %v805
    %v807 = vand.u32 %v66, 4294901760
    %v808 = vsub.f32 %v66, %v807
    %v809 = vand.u32 %v808, 4294901760
    %810 = vmatpush.msra.mxu0 %v809
    %v811 = vand.u32 %v64, 4294901760
    %v812 = vsub.f32 %v64, %v811
    %v813 = vand.u32 %v812, 4294901760
    %814 = vmatpush.msra.mxu0 %v813
    %v815 = vand.u32 %v163, 4294901760
    %816 = vmatmul.f32.gmra.mxu0 %v815
    %v817 = vpop.f32.mrf.mxu0
    %v818 = vadd.f32 %v749, %v817
    %819 = vdwg.mxu0
    %v820 = vand.u32 %v94, 4294901760
    %821 = vmatpush.msra.mxu0 %v820
    %v822 = vand.u32 %v92, 4294901760
    %823 = vmatpush.msra.mxu0 %v822
    %v824 = vand.u32 %v90, 4294901760
    %825 = vmatpush.msra.mxu0 %v824
    %v826 = vand.u32 %v88, 4294901760
    %827 = vmatpush.msra.mxu0 %v826
    %v828 = vand.u32 %v86, 4294901760
    %829 = vmatpush.msra.mxu0 %v828
    %v830 = vand.u32 %v84, 4294901760
    %831 = vmatpush.msra.mxu0 %v830
    %v832 = vand.u32 %v82, 4294901760
    %833 = vmatpush.msra.mxu0 %v832
    %v834 = vand.u32 %v80, 4294901760
    %835 = vmatpush.msra.mxu0 %v834
    %v836 = vand.u32 %v78, 4294901760
    %837 = vmatpush.msra.mxu0 %v836
    %v838 = vand.u32 %v76, 4294901760
    %839 = vmatpush.msra.mxu0 %v838
    %v840 = vand.u32 %v74, 4294901760
    %841 = vmatpush.msra.mxu0 %v840
    %v842 = vand.u32 %v72, 4294901760
    %843 = vmatpush.msra.mxu0 %v842
    %v844 = vand.u32 %v70, 4294901760
    %845 = vmatpush.msra.mxu0 %v844
    %v846 = vand.u32 %v68, 4294901760
    %847 = vmatpush.msra.mxu0 %v846
    %v848 = vand.u32 %v66, 4294901760
    %849 = vmatpush.msra.mxu0 %v848
    %v850 = vand.u32 %v64, 4294901760
    %851 = vmatpush.msra.mxu0 %v850
    %v852 = vand.u32 %v163, 4294901760
    %853 = vmatmul.f32.gmra.mxu0 %v852
    %v854 = vpop.f32.mrf.mxu0
    %v855 = vadd.f32 %v818, %v854
    %856 = vdwg.mxu0
    %v857 = vand.u32 %v126, 4294901760
    %858 = vmatpush.msra.mxu0 %v857
    %v859 = vand.u32 %v124, 4294901760
    %860 = vmatpush.msra.mxu0 %v859
    %v861 = vand.u32 %v122, 4294901760
    %862 = vmatpush.msra.mxu0 %v861
    %v863 = vand.u32 %v120, 4294901760
    %864 = vmatpush.msra.mxu0 %v863
    %v865 = vand.u32 %v118, 4294901760
    %866 = vmatpush.msra.mxu0 %v865
    %v867 = vand.u32 %v116, 4294901760
    %868 = vmatpush.msra.mxu0 %v867
    %v869 = vand.u32 %v114, 4294901760
    %870 = vmatpush.msra.mxu0 %v869
    %v871 = vand.u32 %v112, 4294901760
    %872 = vmatpush.msra.mxu0 %v871
    %v873 = vand.u32 %v110, 4294901760
    %874 = vmatpush.msra.mxu0 %v873
    %v875 = vand.u32 %v108, 4294901760
    %876 = vmatpush.msra.mxu0 %v875
    %v877 = vand.u32 %v106, 4294901760
    %878 = vmatpush.msra.mxu0 %v877
    %v879 = vand.u32 %v104, 4294901760
    %880 = vmatpush.msra.mxu0 %v879
    %v881 = vand.u32 %v102, 4294901760
    %882 = vmatpush.msra.mxu0 %v881
    %v883 = vand.u32 %v100, 4294901760
    %884 = vmatpush.msra.mxu0 %v883
    %v885 = vand.u32 %v98, 4294901760
    %886 = vmatpush.msra.mxu0 %v885
    %v887 = vand.u32 %v96, 4294901760
    %888 = vmatpush.msra.mxu0 %v887
    %v889 = vand.u32 %v164, 4294901760
    %v890 = vsub.f32 %v164, %v889
    %v891 = vand.u32 %v890, 4294901760
    %v892 = vsub.f32 %v890, %v891
    %v893 = vand.u32 %v892, 4294901760
    %894 = vmatmul.f32.gmra.mxu0 %v893
    %v895 = vpop.f32.mrf.mxu0
    %v896 = vadd.f32 %v855, %v895
    %897 = vdwg.mxu0
    %v898 = vand.u32 %v126, 4294901760
    %v899 = vsub.f32 %v126, %v898
    %v900 = vand.u32 %v899, 4294901760
    %v901 = vsub.f32 %v899, %v900
    %v902 = vand.u32 %v901, 4294901760
    %903 = vmatpush.msra.mxu0 %v902
    %v904 = vand.u32 %v124, 4294901760
    %v905 = vsub.f32 %v124, %v904
    %v906 = vand.u32 %v905, 4294901760
    %v907 = vsub.f32 %v905, %v906
    %v908 = vand.u32 %v907, 4294901760
    %909 = vmatpush.msra.mxu0 %v908
    %v910 = vand.u32 %v122, 4294901760
    %v911 = vsub.f32 %v122, %v910
    %v912 = vand.u32 %v911, 4294901760
    %v913 = vsub.f32 %v911, %v912
    %v914 = vand.u32 %v913, 4294901760
    %915 = vmatpush.msra.mxu0 %v914
    %v916 = vand.u32 %v120, 4294901760
    %v917 = vsub.f32 %v120, %v916
    %v918 = vand.u32 %v917, 4294901760
    %v919 = vsub.f32 %v917, %v918
    %v920 = vand.u32 %v919, 4294901760
    %921 = vmatpush.msra.mxu0 %v920
    %v922 = vand.u32 %v118, 4294901760
    %v923 = vsub.f32 %v118, %v922
    %v924 = vand.u32 %v923, 4294901760
    %v925 = vsub.f32 %v923, %v924
    %v926 = vand.u32 %v925, 4294901760
    %927 = vmatpush.msra.mxu0 %v926
    %v928 = vand.u32 %v116, 4294901760
    %v929 = vsub.f32 %v116, %v928
    %v930 = vand.u32 %v929, 4294901760
    %v931 = vsub.f32 %v929, %v930
    %v932 = vand.u32 %v931, 4294901760
    %933 = vmatpush.msra.mxu0 %v932
    %v934 = vand.u32 %v114, 4294901760
    %v935 = vsub.f32 %v114, %v934
    %v936 = vand.u32 %v935, 4294901760
    %v937 = vsub.f32 %v935, %v936
    %v938 = vand.u32 %v937, 4294901760
    %939 = vmatpush.msra.mxu0 %v938
    %v940 = vand.u32 %v112, 4294901760
    %v941 = vsub.f32 %v112, %v940
    %v942 = vand.u32 %v941, 4294901760
    %v943 = vsub.f32 %v941, %v942
    %v944 = vand.u32 %v943, 4294901760
    %945 = vmatpush.msra.mxu0 %v944
    %v946 = vand.u32 %v110, 4294901760
    %v947 = vsub.f32 %v110, %v946
    %v948 = vand.u32 %v947, 4294901760
    %v949 = vsub.f32 %v947, %v948
    %v950 = vand.u32 %v949, 4294901760
    %951 = vmatpush.msra.mxu0 %v950
    %v952 = vand.u32 %v108, 4294901760
    %v953 = vsub.f32 %v108, %v952
    %v954 = vand.u32 %v953, 4294901760
    %v955 = vsub.f32 %v953, %v954
    %v956 = vand.u32 %v955, 4294901760
    %957 = vmatpush.msra.mxu0 %v956
    %v958 = vand.u32 %v106, 4294901760
    %v959 = vsub.f32 %v106, %v958
    %v960 = vand.u32 %v959, 4294901760
    %v961 = vsub.f32 %v959, %v960
    %v962 = vand.u32 %v961, 4294901760
    %963 = vmatpush.msra.mxu0 %v962
    %v964 = vand.u32 %v104, 4294901760
    %v965 = vsub.f32 %v104, %v964
    %v966 = vand.u32 %v965, 4294901760
    %v967 = vsub.f32 %v965, %v966
    %v968 = vand.u32 %v967, 4294901760
    %969 = vmatpush.msra.mxu0 %v968
    %v970 = vand.u32 %v102, 4294901760
    %v971 = vsub.f32 %v102, %v970
    %v972 = vand.u32 %v971, 4294901760
    %v973 = vsub.f32 %v971, %v972
    %v974 = vand.u32 %v973, 4294901760
    %975 = vmatpush.msra.mxu0 %v974
    %v976 = vand.u32 %v100, 4294901760
    %v977 = vsub.f32 %v100, %v976
    %v978 = vand.u32 %v977, 4294901760
    %v979 = vsub.f32 %v977, %v978
    %v980 = vand.u32 %v979, 4294901760
    %981 = vmatpush.msra.mxu0 %v980
    %v982 = vand.u32 %v98, 4294901760
    %v983 = vsub.f32 %v98, %v982
    %v984 = vand.u32 %v983, 4294901760
    %v985 = vsub.f32 %v983, %v984
    %v986 = vand.u32 %v985, 4294901760
    %987 = vmatpush.msra.mxu0 %v986
    %v988 = vand.u32 %v96, 4294901760
    %v989 = vsub.f32 %v96, %v988
    %v990 = vand.u32 %v989, 4294901760
    %v991 = vsub.f32 %v989, %v990
    %v992 = vand.u32 %v991, 4294901760
    %993 = vmatpush.msra.mxu0 %v992
    %v994 = vand.u32 %v164, 4294901760
    %995 = vmatmul.f32.gmra.mxu0 %v994
    %v996 = vpop.f32.mrf.mxu0
    %v997 = vadd.f32 %v896, %v996
    %998 = vdwg.mxu0
    %v999 = vand.u32 %v126, 4294901760
    %v1000 = vsub.f32 %v126, %v999
    %1001 = vmatpush.msra.mxu0 %v1000
    %v1002 = vand.u32 %v124, 4294901760
    %v1003 = vsub.f32 %v124, %v1002
    %1004 = vmatpush.msra.mxu0 %v1003
    %v1005 = vand.u32 %v122, 4294901760
    %v1006 = vsub.f32 %v122, %v1005
    %1007 = vmatpush.msra.mxu0 %v1006
    %v1008 = vand.u32 %v120, 4294901760
    %v1009 = vsub.f32 %v120, %v1008
    %1010 = vmatpush.msra.mxu0 %v1009
    %v1011 = vand.u32 %v118, 4294901760
    %v1012 = vsub.f32 %v118, %v1011
    %1013 = vmatpush.msra.mxu0 %v1012
    %v1014 = vand.u32 %v116, 4294901760
    %v1015 = vsub.f32 %v116, %v1014
    %1016 = vmatpush.msra.mxu0 %v1015
    %v1017 = vand.u32 %v114, 4294901760
    %v1018 = vsub.f32 %v114, %v1017
    %1019 = vmatpush.msra.mxu0 %v1018
    %v1020 = vand.u32 %v112, 4294901760
    %v1021 = vsub.f32 %v112, %v1020
    %1022 = vmatpush.msra.mxu0 %v1021
    %v1023 = vand.u32 %v110, 4294901760
    %v1024 = vsub.f32 %v110, %v1023
    %1025 = vmatpush.msra.mxu0 %v1024
    %v1026 = vand.u32 %v108, 4294901760
    %v1027 = vsub.f32 %v108, %v1026
    %1028 = vmatpush.msra.mxu0 %v1027
    %v1029 = vand.u32 %v106, 4294901760
    %v1030 = vsub.f32 %v106, %v1029
    %1031 = vmatpush.msra.mxu0 %v1030
    %v1032 = vand.u32 %v104, 4294901760
    %v1033 = vsub.f32 %v104, %v1032
    %1034 = vmatpush.msra.mxu0 %v1033
    %v1035 = vand.u32 %v102, 4294901760
    %v1036 = vsub.f32 %v102, %v1035
    %1037 = vmatpush.msra.mxu0 %v1036
    %v1038 = vand.u32 %v100, 4294901760
    %v1039 = vsub.f32 %v100, %v1038
    %1040 = vmatpush.msra.mxu0 %v1039
    %v1041 = vand.u32 %v98, 4294901760
    %v1042 = vsub.f32 %v98, %v1041
    %1043 = vmatpush.msra.mxu0 %v1042
    %v1044 = vand.u32 %v96, 4294901760
    %v1045 = vsub.f32 %v96, %v1044
    %1046 = vmatpush.msra.mxu0 %v1045
    %v1047 = vand.u32 %v164, 4294901760
    %v1048 = vsub.f32 %v164, %v1047
    %1049 = vmatmul.f32.gmra.mxu0 %v1048
    %v1050 = vpop.f32.mrf.mxu0
    %v1051 = vadd.f32 %v997, %v1050
    %1052 = vdwg.mxu0
    %v1053 = vand.u32 %v126, 4294901760
    %1054 = vmatpush.msra.mxu0 %v1053
    %v1055 = vand.u32 %v124, 4294901760
    %1056 = vmatpush.msra.mxu0 %v1055
    %v1057 = vand.u32 %v122, 4294901760
    %1058 = vmatpush.msra.mxu0 %v1057
    %v1059 = vand.u32 %v120, 4294901760
    %1060 = vmatpush.msra.mxu0 %v1059
    %v1061 = vand.u32 %v118, 4294901760
    %1062 = vmatpush.msra.mxu0 %v1061
    %v1063 = vand.u32 %v116, 4294901760
    %1064 = vmatpush.msra.mxu0 %v1063
    %v1065 = vand.u32 %v114, 4294901760
    %1066 = vmatpush.msra.mxu0 %v1065
    %v1067 = vand.u32 %v112, 4294901760
    %1068 = vmatpush.msra.mxu0 %v1067
    %v1069 = vand.u32 %v110, 4294901760
    %1070 = vmatpush.msra.mxu0 %v1069
    %v1071 = vand.u32 %v108, 4294901760
    %1072 = vmatpush.msra.mxu0 %v1071
    %v1073 = vand.u32 %v106, 4294901760
    %1074 = vmatpush.msra.mxu0 %v1073
    %v1075 = vand.u32 %v104, 4294901760
    %1076 = vmatpush.msra.mxu0 %v1075
    %v1077 = vand.u32 %v102, 4294901760
    %1078 = vmatpush.msra.mxu0 %v1077
    %v1079 = vand.u32 %v100, 4294901760
    %1080 = vmatpush.msra.mxu0 %v1079
    %v1081 = vand.u32 %v98, 4294901760
    %1082 = vmatpush.msra.mxu0 %v1081
    %v1083 = vand.u32 %v96, 4294901760
    %1084 = vmatpush.msra.mxu0 %v1083
    %v1085 = vand.u32 %v164, 4294901760
    %v1086 = vsub.f32 %v164, %v1085
    %v1087 = vand.u32 %v1086, 4294901760
    %1088 = vmatmul.f32.gmra.mxu0 %v1087
    %v1089 = vpop.f32.mrf.mxu0
    %v1090 = vadd.f32 %v1051, %v1089
    %1091 = vdwg.mxu0
    %v1092 = vand.u32 %v126, 4294901760
    %v1093 = vsub.f32 %v126, %v1092
    %v1094 = vand.u32 %v1093, 4294901760
    %1095 = vmatpush.msra.mxu0 %v1094
    %v1096 = vand.u32 %v124, 4294901760
    %v1097 = vsub.f32 %v124, %v1096
    %v1098 = vand.u32 %v1097, 4294901760
    %1099 = vmatpush.msra.mxu0 %v1098
    %v1100 = vand.u32 %v122, 4294901760
    %v1101 = vsub.f32 %v122, %v1100
    %v1102 = vand.u32 %v1101, 4294901760
    %1103 = vmatpush.msra.mxu0 %v1102
    %v1104 = vand.u32 %v120, 4294901760
    %v1105 = vsub.f32 %v120, %v1104
    %v1106 = vand.u32 %v1105, 4294901760
    %1107 = vmatpush.msra.mxu0 %v1106
    %v1108 = vand.u32 %v118, 4294901760
    %v1109 = vsub.f32 %v118, %v1108
    %v1110 = vand.u32 %v1109, 4294901760
    %1111 = vmatpush.msra.mxu0 %v1110
    %v1112 = vand.u32 %v116, 4294901760
    %v1113 = vsub.f32 %v116, %v1112
    %v1114 = vand.u32 %v1113, 4294901760
    %1115 = vmatpush.msra.mxu0 %v1114
    %v1116 = vand.u32 %v114, 4294901760
    %v1117 = vsub.f32 %v114, %v1116
    %v1118 = vand.u32 %v1117, 4294901760
    %1119 = vmatpush.msra.mxu0 %v1118
    %v1120 = vand.u32 %v112, 4294901760
    %v1121 = vsub.f32 %v112, %v1120
    %v1122 = vand.u32 %v1121, 4294901760
    %1123 = vmatpush.msra.mxu0 %v1122
    %v1124 = vand.u32 %v110, 4294901760
    %v1125 = vsub.f32 %v110, %v1124
    %v1126 = vand.u32 %v1125, 4294901760
    %1127 = vmatpush.msra.mxu0 %v1126
    %v1128 = vand.u32 %v108, 4294901760
    %v1129 = vsub.f32 %v108, %v1128
    %v1130 = vand.u32 %v1129, 4294901760
    %1131 = vmatpush.msra.mxu0 %v1130
    %v1132 = vand.u32 %v106, 4294901760
    %v1133 = vsub.f32 %v106, %v1132
    %v1134 = vand.u32 %v1133, 4294901760
    %1135 = vmatpush.msra.mxu0 %v1134
    %v1136 = vand.u32 %v104, 4294901760
    %v1137 = vsub.f32 %v104, %v1136
    %v1138 = vand.u32 %v1137, 4294901760
    %1139 = vmatpush.msra.mxu0 %v1138
    %v1140 = vand.u32 %v102, 4294901760
    %v1141 = vsub.f32 %v102, %v1140
    %v1142 = vand.u32 %v1141, 4294901760
    %1143 = vmatpush.msra.mxu0 %v1142
    %v1144 = vand.u32 %v100, 4294901760
    %v1145 = vsub.f32 %v100, %v1144
    %v1146 = vand.u32 %v1145, 4294901760
    %1147 = vmatpush.msra.mxu0 %v1146
    %v1148 = vand.u32 %v98, 4294901760
    %v1149 = vsub.f32 %v98, %v1148
    %v1150 = vand.u32 %v1149, 4294901760
    %1151 = vmatpush.msra.mxu0 %v1150
    %v1152 = vand.u32 %v96, 4294901760
    %v1153 = vsub.f32 %v96, %v1152
    %v1154 = vand.u32 %v1153, 4294901760
    %1155 = vmatpush.msra.mxu0 %v1154
    %v1156 = vand.u32 %v164, 4294901760
    %1157 = vmatmul.f32.gmra.mxu0 %v1156
    %v1158 = vpop.f32.mrf.mxu0
    %v1159 = vadd.f32 %v1090, %v1158
    %1160 = vdwg.mxu0
    %v1161 = vand.u32 %v126, 4294901760
    %1162 = vmatpush.msra.mxu0 %v1161
    %v1163 = vand.u32 %v124, 4294901760
    %1164 = vmatpush.msra.mxu0 %v1163
    %v1165 = vand.u32 %v122, 4294901760
    %1166 = vmatpush.msra.mxu0 %v1165
    %v1167 = vand.u32 %v120, 4294901760
    %1168 = vmatpush.msra.mxu0 %v1167
    %v1169 = vand.u32 %v118, 4294901760
    %1170 = vmatpush.msra.mxu0 %v1169
    %v1171 = vand.u32 %v116, 4294901760
    %1172 = vmatpush.msra.mxu0 %v1171
    %v1173 = vand.u32 %v114, 4294901760
    %1174 = vmatpush.msra.mxu0 %v1173
    %v1175 = vand.u32 %v112, 4294901760
    %1176 = vmatpush.msra.mxu0 %v1175
    %v1177 = vand.u32 %v110, 4294901760
    %1178 = vmatpush.msra.mxu0 %v1177
    %v1179 = vand.u32 %v108, 4294901760
    %1180 = vmatpush.msra.mxu0 %v1179
    %v1181 = vand.u32 %v106, 4294901760
    %1182 = vmatpush.msra.mxu0 %v1181
    %v1183 = vand.u32 %v104, 4294901760
    %1184 = vmatpush.msra.mxu0 %v1183
    %v1185 = vand.u32 %v102, 4294901760
    %1186 = vmatpush.msra.mxu0 %v1185
    %v1187 = vand.u32 %v100, 4294901760
    %1188 = vmatpush.msra.mxu0 %v1187
    %v1189 = vand.u32 %v98, 4294901760
    %1190 = vmatpush.msra.mxu0 %v1189
    %v1191 = vand.u32 %v96, 4294901760
    %1192 = vmatpush.msra.mxu0 %v1191
    %v1193 = vand.u32 %v164, 4294901760
    %1194 = vmatmul.f32.gmra.mxu0 %v1193
    %v1195 = vpop.f32.mrf.mxu0
    %v1196 = vadd.f32 %v1159, %v1195
    %1197 = vdwg.mxu0
    %v1198 = vand.u32 %v158, 4294901760
    %1199 = vmatpush.msra.mxu0 %v1198
    %v1200 = vand.u32 %v156, 4294901760
    %1201 = vmatpush.msra.mxu0 %v1200
    %v1202 = vand.u32 %v154, 4294901760
    %1203 = vmatpush.msra.mxu0 %v1202
    %v1204 = vand.u32 %v152, 4294901760
    %1205 = vmatpush.msra.mxu0 %v1204
    %v1206 = vand.u32 %v150, 4294901760
    %1207 = vmatpush.msra.mxu0 %v1206
    %v1208 = vand.u32 %v148, 4294901760
    %1209 = vmatpush.msra.mxu0 %v1208
    %v1210 = vand.u32 %v146, 4294901760
    %1211 = vmatpush.msra.mxu0 %v1210
    %v1212 = vand.u32 %v144, 4294901760
    %1213 = vmatpush.msra.mxu0 %v1212
    %v1214 = vand.u32 %v142, 4294901760
    %1215 = vmatpush.msra.mxu0 %v1214
    %v1216 = vand.u32 %v140, 4294901760
    %1217 = vmatpush.msra.mxu0 %v1216
    %v1218 = vand.u32 %v138, 4294901760
    %1219 = vmatpush.msra.mxu0 %v1218
    %v1220 = vand.u32 %v136, 4294901760
    %1221 = vmatpush.msra.mxu0 %v1220
    %v1222 = vand.u32 %v134, 4294901760
    %1223 = vmatpush.msra.mxu0 %v1222
    %v1224 = vand.u32 %v132, 4294901760
    %1225 = vmatpush.msra.mxu0 %v1224
    %v1226 = vand.u32 %v130, 4294901760
    %1227 = vmatpush.msra.mxu0 %v1226
    %v1228 = vand.u32 %v128, 4294901760
    %1229 = vmatpush.msra.mxu0 %v1228
    %v1230 = vand.u32 %v165, 4294901760
    %v1231 = vsub.f32 %v165, %v1230
    %v1232 = vand.u32 %v1231, 4294901760
    %v1233 = vsub.f32 %v1231, %v1232
    %v1234 = vand.u32 %v1233, 4294901760
    %1235 = vmatmul.f32.gmra.mxu0 %v1234
    %v1236 = vpop.f32.mrf.mxu0
    %v1237 = vadd.f32 %v1196, %v1236
    %1238 = vdwg.mxu0
    %v1239 = vand.u32 %v158, 4294901760
    %v1240 = vsub.f32 %v158, %v1239
    %v1241 = vand.u32 %v1240, 4294901760
    %v1242 = vsub.f32 %v1240, %v1241
    %v1243 = vand.u32 %v1242, 4294901760
    %1244 = vmatpush.msra.mxu0 %v1243
    %v1245 = vand.u32 %v156, 4294901760
    %v1246 = vsub.f32 %v156, %v1245
    %v1247 = vand.u32 %v1246, 4294901760
    %v1248 = vsub.f32 %v1246, %v1247
    %v1249 = vand.u32 %v1248, 4294901760
    %1250 = vmatpush.msra.mxu0 %v1249
    %v1251 = vand.u32 %v154, 4294901760
    %v1252 = vsub.f32 %v154, %v1251
    %v1253 = vand.u32 %v1252, 4294901760
    %v1254 = vsub.f32 %v1252, %v1253
    %v1255 = vand.u32 %v1254, 4294901760
    %1256 = vmatpush.msra.mxu0 %v1255
    %v1257 = vand.u32 %v152, 4294901760
    %v1258 = vsub.f32 %v152, %v1257
    %v1259 = vand.u32 %v1258, 4294901760
    %v1260 = vsub.f32 %v1258, %v1259
    %v1261 = vand.u32 %v1260, 4294901760
    %1262 = vmatpush.msra.mxu0 %v1261
    %v1263 = vand.u32 %v150, 4294901760
    %v1264 = vsub.f32 %v150, %v1263
    %v1265 = vand.u32 %v1264, 4294901760
    %v1266 = vsub.f32 %v1264, %v1265
    %v1267 = vand.u32 %v1266, 4294901760
    %1268 = vmatpush.msra.mxu0 %v1267
    %v1269 = vand.u32 %v148, 4294901760
    %v1270 = vsub.f32 %v148, %v1269
    %v1271 = vand.u32 %v1270, 4294901760
    %v1272 = vsub.f32 %v1270, %v1271
    %v1273 = vand.u32 %v1272, 4294901760
    %1274 = vmatpush.msra.mxu0 %v1273
    %v1275 = vand.u32 %v146, 4294901760
    %v1276 = vsub.f32 %v146, %v1275
    %v1277 = vand.u32 %v1276, 4294901760
    %v1278 = vsub.f32 %v1276, %v1277
    %v1279 = vand.u32 %v1278, 4294901760
    %1280 = vmatpush.msra.mxu0 %v1279
    %v1281 = vand.u32 %v144, 4294901760
    %v1282 = vsub.f32 %v144, %v1281
    %v1283 = vand.u32 %v1282, 4294901760
    %v1284 = vsub.f32 %v1282, %v1283
    %v1285 = vand.u32 %v1284, 4294901760
    %1286 = vmatpush.msra.mxu0 %v1285
    %v1287 = vand.u32 %v142, 4294901760
    %v1288 = vsub.f32 %v142, %v1287
    %v1289 = vand.u32 %v1288, 4294901760
    %v1290 = vsub.f32 %v1288, %v1289
    %v1291 = vand.u32 %v1290, 4294901760
    %1292 = vmatpush.msra.mxu0 %v1291
    %v1293 = vand.u32 %v140, 4294901760
    %v1294 = vsub.f32 %v140, %v1293
    %v1295 = vand.u32 %v1294, 4294901760
    %v1296 = vsub.f32 %v1294, %v1295
    %v1297 = vand.u32 %v1296, 4294901760
    %1298 = vmatpush.msra.mxu0 %v1297
    %v1299 = vand.u32 %v138, 4294901760
    %v1300 = vsub.f32 %v138, %v1299
    %v1301 = vand.u32 %v1300, 4294901760
    %v1302 = vsub.f32 %v1300, %v1301
    %v1303 = vand.u32 %v1302, 4294901760
    %1304 = vmatpush.msra.mxu0 %v1303
    %v1305 = vand.u32 %v136, 4294901760
    %v1306 = vsub.f32 %v136, %v1305
    %v1307 = vand.u32 %v1306, 4294901760
    %v1308 = vsub.f32 %v1306, %v1307
    %v1309 = vand.u32 %v1308, 4294901760
    %1310 = vmatpush.msra.mxu0 %v1309
    %v1311 = vand.u32 %v134, 4294901760
    %v1312 = vsub.f32 %v134, %v1311
    %v1313 = vand.u32 %v1312, 4294901760
    %v1314 = vsub.f32 %v1312, %v1313
    %v1315 = vand.u32 %v1314, 4294901760
    %1316 = vmatpush.msra.mxu0 %v1315
    %v1317 = vand.u32 %v132, 4294901760
    %v1318 = vsub.f32 %v132, %v1317
    %v1319 = vand.u32 %v1318, 4294901760
    %v1320 = vsub.f32 %v1318, %v1319
    %v1321 = vand.u32 %v1320, 4294901760
    %1322 = vmatpush.msra.mxu0 %v1321
    %v1323 = vand.u32 %v130, 4294901760
    %v1324 = vsub.f32 %v130, %v1323
    %v1325 = vand.u32 %v1324, 4294901760
    %v1326 = vsub.f32 %v1324, %v1325
    %v1327 = vand.u32 %v1326, 4294901760
    %1328 = vmatpush.msra.mxu0 %v1327
    %v1329 = vand.u32 %v128, 4294901760
    %v1330 = vsub.f32 %v128, %v1329
    %v1331 = vand.u32 %v1330, 4294901760
    %v1332 = vsub.f32 %v1330, %v1331
    %v1333 = vand.u32 %v1332, 4294901760
    %1334 = vmatpush.msra.mxu0 %v1333
    %v1335 = vand.u32 %v165, 4294901760
    %1336 = vmatmul.f32.gmra.mxu0 %v1335
    %v1337 = vpop.f32.mrf.mxu0
    %v1338 = vadd.f32 %v1237, %v1337
    %1339 = vdwg.mxu0
    %v1340 = vand.u32 %v158, 4294901760
    %v1341 = vsub.f32 %v158, %v1340
    %1342 = vmatpush.msra.mxu0 %v1341
    %v1343 = vand.u32 %v156, 4294901760
    %v1344 = vsub.f32 %v156, %v1343
    %1345 = vmatpush.msra.mxu0 %v1344
    %v1346 = vand.u32 %v154, 4294901760
    %v1347 = vsub.f32 %v154, %v1346
    %1348 = vmatpush.msra.mxu0 %v1347
    %v1349 = vand.u32 %v152, 4294901760
    %v1350 = vsub.f32 %v152, %v1349
    %1351 = vmatpush.msra.mxu0 %v1350
    %v1352 = vand.u32 %v150, 4294901760
    %v1353 = vsub.f32 %v150, %v1352
    %1354 = vmatpush.msra.mxu0 %v1353
    %v1355 = vand.u32 %v148, 4294901760
    %v1356 = vsub.f32 %v148, %v1355
    %1357 = vmatpush.msra.mxu0 %v1356
    %v1358 = vand.u32 %v146, 4294901760
    %v1359 = vsub.f32 %v146, %v1358
    %1360 = vmatpush.msra.mxu0 %v1359
    %v1361 = vand.u32 %v144, 4294901760
    %v1362 = vsub.f32 %v144, %v1361
    %1363 = vmatpush.msra.mxu0 %v1362
    %v1364 = vand.u32 %v142, 4294901760
    %v1365 = vsub.f32 %v142, %v1364
    %1366 = vmatpush.msra.mxu0 %v1365
    %v1367 = vand.u32 %v140, 4294901760
    %v1368 = vsub.f32 %v140, %v1367
    %1369 = vmatpush.msra.mxu0 %v1368
    %v1370 = vand.u32 %v138, 4294901760
    %v1371 = vsub.f32 %v138, %v1370
    %1372 = vmatpush.msra.mxu0 %v1371
    %v1373 = vand.u32 %v136, 4294901760
    %v1374 = vsub.f32 %v136, %v1373
    %1375 = vmatpush.msra.mxu0 %v1374
    %v1376 = vand.u32 %v134, 4294901760
    %v1377 = vsub.f32 %v134, %v1376
    %1378 = vmatpush.msra.mxu0 %v1377
    %v1379 = vand.u32 %v132, 4294901760
    %v1380 = vsub.f32 %v132, %v1379
    %1381 = vmatpush.msra.mxu0 %v1380
    %v1382 = vand.u32 %v130, 4294901760
    %v1383 = vsub.f32 %v130, %v1382
    %1384 = vmatpush.msra.mxu0 %v1383
    %v1385 = vand.u32 %v128, 4294901760
    %v1386 = vsub.f32 %v128, %v1385
    %1387 = vmatpush.msra.mxu0 %v1386
    %v1388 = vand.u32 %v165, 4294901760
    %v1389 = vsub.f32 %v165, %v1388
    %1390 = vmatmul.f32.gmra.mxu0 %v1389
    %v1391 = vpop.f32.mrf.mxu0
    %v1392 = vadd.f32 %v1338, %v1391
    %1393 = vdwg.mxu0
    %v1394 = vand.u32 %v158, 4294901760
    %1395 = vmatpush.msra.mxu0 %v1394
    %v1396 = vand.u32 %v156, 4294901760
    %1397 = vmatpush.msra.mxu0 %v1396
    %v1398 = vand.u32 %v154, 4294901760
    %1399 = vmatpush.msra.mxu0 %v1398
    %v1400 = vand.u32 %v152, 4294901760
    %1401 = vmatpush.msra.mxu0 %v1400
    %v1402 = vand.u32 %v150, 4294901760
    %1403 = vmatpush.msra.mxu0 %v1402
    %v1404 = vand.u32 %v148, 4294901760
    %1405 = vmatpush.msra.mxu0 %v1404
    %v1406 = vand.u32 %v146, 4294901760
    %1407 = vmatpush.msra.mxu0 %v1406
    %v1408 = vand.u32 %v144, 4294901760
    %1409 = vmatpush.msra.mxu0 %v1408
    %v1410 = vand.u32 %v142, 4294901760
    %1411 = vmatpush.msra.mxu0 %v1410
    %v1412 = vand.u32 %v140, 4294901760
    %1413 = vmatpush.msra.mxu0 %v1412
    %v1414 = vand.u32 %v138, 4294901760
    %1415 = vmatpush.msra.mxu0 %v1414
    %v1416 = vand.u32 %v136, 4294901760
    %1417 = vmatpush.msra.mxu0 %v1416
    %v1418 = vand.u32 %v134, 4294901760
    %1419 = vmatpush.msra.mxu0 %v1418
    %v1420 = vand.u32 %v132, 4294901760
    %1421 = vmatpush.msra.mxu0 %v1420
    %v1422 = vand.u32 %v130, 4294901760
    %1423 = vmatpush.msra.mxu0 %v1422
    %v1424 = vand.u32 %v128, 4294901760
    %1425 = vmatpush.msra.mxu0 %v1424
    %v1426 = vand.u32 %v165, 4294901760
    %v1427 = vsub.f32 %v165, %v1426
    %v1428 = vand.u32 %v1427, 4294901760
    %1429 = vmatmul.f32.gmra.mxu0 %v1428
    %v1430 = vpop.f32.mrf.mxu0
    %v1431 = vadd.f32 %v1392, %v1430
    %1432 = vdwg.mxu0
    %v1433 = vand.u32 %v158, 4294901760
    %v1434 = vsub.f32 %v158, %v1433
    %v1435 = vand.u32 %v1434, 4294901760
    %1436 = vmatpush.msra.mxu0 %v1435
    %v1437 = vand.u32 %v156, 4294901760
    %v1438 = vsub.f32 %v156, %v1437
    %v1439 = vand.u32 %v1438, 4294901760
    %1440 = vmatpush.msra.mxu0 %v1439
    %v1441 = vand.u32 %v154, 4294901760
    %v1442 = vsub.f32 %v154, %v1441
    %v1443 = vand.u32 %v1442, 4294901760
    %1444 = vmatpush.msra.mxu0 %v1443
    %v1445 = vand.u32 %v152, 4294901760
    %v1446 = vsub.f32 %v152, %v1445
    %v1447 = vand.u32 %v1446, 4294901760
    %1448 = vmatpush.msra.mxu0 %v1447
    %v1449 = vand.u32 %v150, 4294901760
    %v1450 = vsub.f32 %v150, %v1449
    %v1451 = vand.u32 %v1450, 4294901760
    %1452 = vmatpush.msra.mxu0 %v1451
    %v1453 = vand.u32 %v148, 4294901760
    %v1454 = vsub.f32 %v148, %v1453
    %v1455 = vand.u32 %v1454, 4294901760
    %1456 = vmatpush.msra.mxu0 %v1455
    %v1457 = vand.u32 %v146, 4294901760
    %v1458 = vsub.f32 %v146, %v1457
    %v1459 = vand.u32 %v1458, 4294901760
    %1460 = vmatpush.msra.mxu0 %v1459
    %v1461 = vand.u32 %v144, 4294901760
    %v1462 = vsub.f32 %v144, %v1461
    %v1463 = vand.u32 %v1462, 4294901760
    %1464 = vmatpush.msra.mxu0 %v1463
    %v1465 = vand.u32 %v142, 4294901760
    %v1466 = vsub.f32 %v142, %v1465
    %v1467 = vand.u32 %v1466, 4294901760
    %1468 = vmatpush.msra.mxu0 %v1467
    %v1469 = vand.u32 %v140, 4294901760
    %v1470 = vsub.f32 %v140, %v1469
    %v1471 = vand.u32 %v1470, 4294901760
    %1472 = vmatpush.msra.mxu0 %v1471
    %v1473 = vand.u32 %v138, 4294901760
    %v1474 = vsub.f32 %v138, %v1473
    %v1475 = vand.u32 %v1474, 4294901760
    %1476 = vmatpush.msra.mxu0 %v1475
    %v1477 = vand.u32 %v136, 4294901760
    %v1478 = vsub.f32 %v136, %v1477
    %v1479 = vand.u32 %v1478, 4294901760
    %1480 = vmatpush.msra.mxu0 %v1479
    %v1481 = vand.u32 %v134, 4294901760
    %v1482 = vsub.f32 %v134, %v1481
    %v1483 = vand.u32 %v1482, 4294901760
    %1484 = vmatpush.msra.mxu0 %v1483
    %v1485 = vand.u32 %v132, 4294901760
    %v1486 = vsub.f32 %v132, %v1485
    %v1487 = vand.u32 %v1486, 4294901760
    %1488 = vmatpush.msra.mxu0 %v1487
    %v1489 = vand.u32 %v130, 4294901760
    %v1490 = vsub.f32 %v130, %v1489
    %v1491 = vand.u32 %v1490, 4294901760
    %1492 = vmatpush.msra.mxu0 %v1491
    %v1493 = vand.u32 %v128, 4294901760
    %v1494 = vsub.f32 %v128, %v1493
    %v1495 = vand.u32 %v1494, 4294901760
    %1496 = vmatpush.msra.mxu0 %v1495
    %v1497 = vand.u32 %v165, 4294901760
    %1498 = vmatmul.f32.gmra.mxu0 %v1497
    %v1499 = vpop.f32.mrf.mxu0
    %v1500 = vadd.f32 %v1431, %v1499
    %1501 = vdwg.mxu0
    %v1502 = vand.u32 %v158, 4294901760
    %1503 = vmatpush.msra.mxu0 %v1502
    %v1504 = vand.u32 %v156, 4294901760
    %1505 = vmatpush.msra.mxu0 %v1504
    %v1506 = vand.u32 %v154, 4294901760
    %1507 = vmatpush.msra.mxu0 %v1506
    %v1508 = vand.u32 %v152, 4294901760
    %1509 = vmatpush.msra.mxu0 %v1508
    %v1510 = vand.u32 %v150, 4294901760
    %1511 = vmatpush.msra.mxu0 %v1510
    %v1512 = vand.u32 %v148, 4294901760
    %1513 = vmatpush.msra.mxu0 %v1512
    %v1514 = vand.u32 %v146, 4294901760
    %1515 = vmatpush.msra.mxu0 %v1514
    %v1516 = vand.u32 %v144, 4294901760
    %1517 = vmatpush.msra.mxu0 %v1516
    %v1518 = vand.u32 %v142, 4294901760
    %1519 = vmatpush.msra.mxu0 %v1518
    %v1520 = vand.u32 %v140, 4294901760
    %1521 = vmatpush.msra.mxu0 %v1520
    %v1522 = vand.u32 %v138, 4294901760
    %1523 = vmatpush.msra.mxu0 %v1522
    %v1524 = vand.u32 %v136, 4294901760
    %1525 = vmatpush.msra.mxu0 %v1524
    %v1526 = vand.u32 %v134, 4294901760
    %1527 = vmatpush.msra.mxu0 %v1526
    %v1528 = vand.u32 %v132, 4294901760
    %1529 = vmatpush.msra.mxu0 %v1528
    %v1530 = vand.u32 %v130, 4294901760
    %1531 = vmatpush.msra.mxu0 %v1530
    %v1532 = vand.u32 %v128, 4294901760
    %1533 = vmatpush.msra.mxu0 %v1532
    %v1534 = vand.u32 %v165, 4294901760
    %1535 = vmatmul.f32.gmra.mxu0 %v1534
    %v1536 = vpop.f32.mrf.mxu0
    %v1537 = vadd.f32 %v1500, %v1536
    %1538 = vdwg.mxu0
    %v1539 = vand.u32 %v63, 4294901760
    %1540 = vmatpush.msra.mxu0 %v1539
    %v1541 = vand.u32 %v61, 4294901760
    %1542 = vmatpush.msra.mxu0 %v1541
    %v1543 = vand.u32 %v59, 4294901760
    %1544 = vmatpush.msra.mxu0 %v1543
    %v1545 = vand.u32 %v57, 4294901760
    %1546 = vmatpush.msra.mxu0 %v1545
    %v1547 = vand.u32 %v55, 4294901760
    %1548 = vmatpush.msra.mxu0 %v1547
    %v1549 = vand.u32 %v53, 4294901760
    %1550 = vmatpush.msra.mxu0 %v1549
    %v1551 = vand.u32 %v51, 4294901760
    %1552 = vmatpush.msra.mxu0 %v1551
    %v1553 = vand.u32 %v49, 4294901760
    %1554 = vmatpush.msra.mxu0 %v1553
    %v1555 = vand.u32 %v47, 4294901760
    %1556 = vmatpush.msra.mxu0 %v1555
    %v1557 = vand.u32 %v45, 4294901760
    %1558 = vmatpush.msra.mxu0 %v1557
    %v1559 = vand.u32 %v43, 4294901760
    %1560 = vmatpush.msra.mxu0 %v1559
    %v1561 = vand.u32 %v41, 4294901760
    %1562 = vmatpush.msra.mxu0 %v1561
    %v1563 = vand.u32 %v39, 4294901760
    %1564 = vmatpush.msra.mxu0 %v1563
    %v1565 = vand.u32 %v37, 4294901760
    %1566 = vmatpush.msra.mxu0 %v1565
    %v1567 = vand.u32 %v35, 4294901760
    %1568 = vmatpush.msra.mxu0 %v1567
    %v1569 = vand.u32 %v33, 4294901760
    %1570 = vmatpush.msra.mxu0 %v1569
    %v1571 = vand.u32 %v162, 4294901760
    %v1572 = vsub.f32 %v162, %v1571
    %v1573 = vand.u32 %v1572, 4294901760
    %v1574 = vsub.f32 %v1572, %v1573
    %v1575 = vand.u32 %v1574, 4294901760
    %1576 = vmatmul.f32.gmra.mxu0 %v1575
    %v1577 = vpop.f32.mrf.mxu0
    %v1578 = vadd.f32 %v172, %v1577
    %1579 = vdwg.mxu0
    %v1580 = vand.u32 %v63, 4294901760
    %v1581 = vsub.f32 %v63, %v1580
    %v1582 = vand.u32 %v1581, 4294901760
    %v1583 = vsub.f32 %v1581, %v1582
    %v1584 = vand.u32 %v1583, 4294901760
    %1585 = vmatpush.msra.mxu0 %v1584
    %v1586 = vand.u32 %v61, 4294901760
    %v1587 = vsub.f32 %v61, %v1586
    %v1588 = vand.u32 %v1587, 4294901760
    %v1589 = vsub.f32 %v1587, %v1588
    %v1590 = vand.u32 %v1589, 4294901760
    %1591 = vmatpush.msra.mxu0 %v1590
    %v1592 = vand.u32 %v59, 4294901760
    %v1593 = vsub.f32 %v59, %v1592
    %v1594 = vand.u32 %v1593, 4294901760
    %v1595 = vsub.f32 %v1593, %v1594
    %v1596 = vand.u32 %v1595, 4294901760
    %1597 = vmatpush.msra.mxu0 %v1596
    %v1598 = vand.u32 %v57, 4294901760
    %v1599 = vsub.f32 %v57, %v1598
    %v1600 = vand.u32 %v1599, 4294901760
    %v1601 = vsub.f32 %v1599, %v1600
    %v1602 = vand.u32 %v1601, 4294901760
    %1603 = vmatpush.msra.mxu0 %v1602
    %v1604 = vand.u32 %v55, 4294901760
    %v1605 = vsub.f32 %v55, %v1604
    %v1606 = vand.u32 %v1605, 4294901760
    %v1607 = vsub.f32 %v1605, %v1606
    %v1608 = vand.u32 %v1607, 4294901760
    %1609 = vmatpush.msra.mxu0 %v1608
    %v1610 = vand.u32 %v53, 4294901760
    %v1611 = vsub.f32 %v53, %v1610
    %v1612 = vand.u32 %v1611, 4294901760
    %v1613 = vsub.f32 %v1611, %v1612
    %v1614 = vand.u32 %v1613, 4294901760
    %1615 = vmatpush.msra.mxu0 %v1614
    %v1616 = vand.u32 %v51, 4294901760
    %v1617 = vsub.f32 %v51, %v1616
    %v1618 = vand.u32 %v1617, 4294901760
    %v1619 = vsub.f32 %v1617, %v1618
    %v1620 = vand.u32 %v1619, 4294901760
    %1621 = vmatpush.msra.mxu0 %v1620
    %v1622 = vand.u32 %v49, 4294901760
    %v1623 = vsub.f32 %v49, %v1622
    %v1624 = vand.u32 %v1623, 4294901760
    %v1625 = vsub.f32 %v1623, %v1624
    %v1626 = vand.u32 %v1625, 4294901760
    %1627 = vmatpush.msra.mxu0 %v1626
    %v1628 = vand.u32 %v47, 4294901760
    %v1629 = vsub.f32 %v47, %v1628
    %v1630 = vand.u32 %v1629, 4294901760
    %v1631 = vsub.f32 %v1629, %v1630
    %v1632 = vand.u32 %v1631, 4294901760
    %1633 = vmatpush.msra.mxu0 %v1632
    %v1634 = vand.u32 %v45, 4294901760
    %v1635 = vsub.f32 %v45, %v1634
    %v1636 = vand.u32 %v1635, 4294901760
    %v1637 = vsub.f32 %v1635, %v1636
    %v1638 = vand.u32 %v1637, 4294901760
    %1639 = vmatpush.msra.mxu0 %v1638
    %v1640 = vand.u32 %v43, 4294901760
    %v1641 = vsub.f32 %v43, %v1640
    %v1642 = vand.u32 %v1641, 4294901760
    %v1643 = vsub.f32 %v1641, %v1642
    %v1644 = vand.u32 %v1643, 4294901760
    %1645 = vmatpush.msra.mxu0 %v1644
    %v1646 = vand.u32 %v41, 4294901760
    %v1647 = vsub.f32 %v41, %v1646
    %v1648 = vand.u32 %v1647, 4294901760
    %v1649 = vsub.f32 %v1647, %v1648
    %v1650 = vand.u32 %v1649, 4294901760
    %1651 = vmatpush.msra.mxu0 %v1650
    %v1652 = vand.u32 %v39, 4294901760
    %v1653 = vsub.f32 %v39, %v1652
    %v1654 = vand.u32 %v1653, 4294901760
    %v1655 = vsub.f32 %v1653, %v1654
    %v1656 = vand.u32 %v1655, 4294901760
    %1657 = vmatpush.msra.mxu0 %v1656
    %v1658 = vand.u32 %v37, 4294901760
    %v1659 = vsub.f32 %v37, %v1658
    %v1660 = vand.u32 %v1659, 4294901760
    %v1661 = vsub.f32 %v1659, %v1660
    %v1662 = vand.u32 %v1661, 4294901760
    %1663 = vmatpush.msra.mxu0 %v1662
    %v1664 = vand.u32 %v35, 4294901760
    %v1665 = vsub.f32 %v35, %v1664
    %v1666 = vand.u32 %v1665, 4294901760
    %v1667 = vsub.f32 %v1665, %v1666
    %v1668 = vand.u32 %v1667, 4294901760
    %1669 = vmatpush.msra.mxu0 %v1668
    %v1670 = vand.u32 %v33, 4294901760
    %v1671 = vsub.f32 %v33, %v1670
    %v1672 = vand.u32 %v1671, 4294901760
    %v1673 = vsub.f32 %v1671, %v1672
    %v1674 = vand.u32 %v1673, 4294901760
    %1675 = vmatpush.msra.mxu0 %v1674
    %v1676 = vand.u32 %v162, 4294901760
    %1677 = vmatmul.f32.gmra.mxu0 %v1676
    %v1678 = vpop.f32.mrf.mxu0
    %v1679 = vadd.f32 %v1578, %v1678
    %1680 = vdwg.mxu0
    %v1681 = vand.u32 %v63, 4294901760
    %v1682 = vsub.f32 %v63, %v1681
    %1683 = vmatpush.msra.mxu0 %v1682
    %v1684 = vand.u32 %v61, 4294901760
    %v1685 = vsub.f32 %v61, %v1684
    %1686 = vmatpush.msra.mxu0 %v1685
    %v1687 = vand.u32 %v59, 4294901760
    %v1688 = vsub.f32 %v59, %v1687
    %1689 = vmatpush.msra.mxu0 %v1688
    %v1690 = vand.u32 %v57, 4294901760
    %v1691 = vsub.f32 %v57, %v1690
    %1692 = vmatpush.msra.mxu0 %v1691
    %v1693 = vand.u32 %v55, 4294901760
    %v1694 = vsub.f32 %v55, %v1693
    %1695 = vmatpush.msra.mxu0 %v1694
    %v1696 = vand.u32 %v53, 4294901760
    %v1697 = vsub.f32 %v53, %v1696
    %1698 = vmatpush.msra.mxu0 %v1697
    %v1699 = vand.u32 %v51, 4294901760
    %v1700 = vsub.f32 %v51, %v1699
    %1701 = vmatpush.msra.mxu0 %v1700
    %v1702 = vand.u32 %v49, 4294901760
    %v1703 = vsub.f32 %v49, %v1702
    %1704 = vmatpush.msra.mxu0 %v1703
    %v1705 = vand.u32 %v47, 4294901760
    %v1706 = vsub.f32 %v47, %v1705
    %1707 = vmatpush.msra.mxu0 %v1706
    %v1708 = vand.u32 %v45, 4294901760
    %v1709 = vsub.f32 %v45, %v1708
    %1710 = vmatpush.msra.mxu0 %v1709
    %v1711 = vand.u32 %v43, 4294901760
    %v1712 = vsub.f32 %v43, %v1711
    %1713 = vmatpush.msra.mxu0 %v1712
    %v1714 = vand.u32 %v41, 4294901760
    %v1715 = vsub.f32 %v41, %v1714
    %1716 = vmatpush.msra.mxu0 %v1715
    %v1717 = vand.u32 %v39, 4294901760
    %v1718 = vsub.f32 %v39, %v1717
    %1719 = vmatpush.msra.mxu0 %v1718
    %v1720 = vand.u32 %v37, 4294901760
    %v1721 = vsub.f32 %v37, %v1720
    %1722 = vmatpush.msra.mxu0 %v1721
    %v1723 = vand.u32 %v35, 4294901760
    %v1724 = vsub.f32 %v35, %v1723
    %1725 = vmatpush.msra.mxu0 %v1724
    %v1726 = vand.u32 %v33, 4294901760
    %v1727 = vsub.f32 %v33, %v1726
    %1728 = vmatpush.msra.mxu0 %v1727
    %v1729 = vand.u32 %v162, 4294901760
    %v1730 = vsub.f32 %v162, %v1729
    %1731 = vmatmul.f32.gmra.mxu0 %v1730
    %v1732 = vpop.f32.mrf.mxu0
    %v1733 = vadd.f32 %v1679, %v1732
    %1734 = vdwg.mxu0
    %v1735 = vand.u32 %v63, 4294901760
    %1736 = vmatpush.msra.mxu0 %v1735
    %v1737 = vand.u32 %v61, 4294901760
    %1738 = vmatpush.msra.mxu0 %v1737
    %v1739 = vand.u32 %v59, 4294901760
    %1740 = vmatpush.msra.mxu0 %v1739
    %v1741 = vand.u32 %v57, 4294901760
    %1742 = vmatpush.msra.mxu0 %v1741
    %v1743 = vand.u32 %v55, 4294901760
    %1744 = vmatpush.msra.mxu0 %v1743
    %v1745 = vand.u32 %v53, 4294901760
    %1746 = vmatpush.msra.mxu0 %v1745
    %v1747 = vand.u32 %v51, 4294901760
    %1748 = vmatpush.msra.mxu0 %v1747
    %v1749 = vand.u32 %v49, 4294901760
    %1750 = vmatpush.msra.mxu0 %v1749
    %v1751 = vand.u32 %v47, 4294901760
    %1752 = vmatpush.msra.mxu0 %v1751
    %v1753 = vand.u32 %v45, 4294901760
    %1754 = vmatpush.msra.mxu0 %v1753
    %v1755 = vand.u32 %v43, 4294901760
    %1756 = vmatpush.msra.mxu0 %v1755
    %v1757 = vand.u32 %v41, 4294901760
    %1758 = vmatpush.msra.mxu0 %v1757
    %v1759 = vand.u32 %v39, 4294901760
    %1760 = vmatpush.msra.mxu0 %v1759
    %v1761 = vand.u32 %v37, 4294901760
    %1762 = vmatpush.msra.mxu0 %v1761
    %v1763 = vand.u32 %v35, 4294901760
    %1764 = vmatpush.msra.mxu0 %v1763
    %v1765 = vand.u32 %v33, 4294901760
    %1766 = vmatpush.msra.mxu0 %v1765
    %v1767 = vand.u32 %v162, 4294901760
    %v1768 = vsub.f32 %v162, %v1767
    %v1769 = vand.u32 %v1768, 4294901760
    %1770 = vmatmul.f32.gmra.mxu0 %v1769
    %v1771 = vpop.f32.mrf.mxu0
    %v1772 = vadd.f32 %v1733, %v1771
    %1773 = vdwg.mxu0
    %v1774 = vand.u32 %v63, 4294901760
    %v1775 = vsub.f32 %v63, %v1774
    %v1776 = vand.u32 %v1775, 4294901760
    %1777 = vmatpush.msra.mxu0 %v1776
    %v1778 = vand.u32 %v61, 4294901760
    %v1779 = vsub.f32 %v61, %v1778
    %v1780 = vand.u32 %v1779, 4294901760
    %1781 = vmatpush.msra.mxu0 %v1780
    %v1782 = vand.u32 %v59, 4294901760
    %v1783 = vsub.f32 %v59, %v1782
    %v1784 = vand.u32 %v1783, 4294901760
    %1785 = vmatpush.msra.mxu0 %v1784
    %v1786 = vand.u32 %v57, 4294901760
    %v1787 = vsub.f32 %v57, %v1786
    %v1788 = vand.u32 %v1787, 4294901760
    %1789 = vmatpush.msra.mxu0 %v1788
    %v1790 = vand.u32 %v55, 4294901760
    %v1791 = vsub.f32 %v55, %v1790
    %v1792 = vand.u32 %v1791, 4294901760
    %1793 = vmatpush.msra.mxu0 %v1792
    %v1794 = vand.u32 %v53, 4294901760
    %v1795 = vsub.f32 %v53, %v1794
    %v1796 = vand.u32 %v1795, 4294901760
    %1797 = vmatpush.msra.mxu0 %v1796
    %v1798 = vand.u32 %v51, 4294901760
    %v1799 = vsub.f32 %v51, %v1798
    %v1800 = vand.u32 %v1799, 4294901760
    %1801 = vmatpush.msra.mxu0 %v1800
    %v1802 = vand.u32 %v49, 4294901760
    %v1803 = vsub.f32 %v49, %v1802
    %v1804 = vand.u32 %v1803, 4294901760
    %1805 = vmatpush.msra.mxu0 %v1804
    %v1806 = vand.u32 %v47, 4294901760
    %v1807 = vsub.f32 %v47, %v1806
    %v1808 = vand.u32 %v1807, 4294901760
    %1809 = vmatpush.msra.mxu0 %v1808
    %v1810 = vand.u32 %v45, 4294901760
    %v1811 = vsub.f32 %v45, %v1810
    %v1812 = vand.u32 %v1811, 4294901760
    %1813 = vmatpush.msra.mxu0 %v1812
    %v1814 = vand.u32 %v43, 4294901760
    %v1815 = vsub.f32 %v43, %v1814
    %v1816 = vand.u32 %v1815, 4294901760
    %1817 = vmatpush.msra.mxu0 %v1816
    %v1818 = vand.u32 %v41, 4294901760
    %v1819 = vsub.f32 %v41, %v1818
    %v1820 = vand.u32 %v1819, 4294901760
    %1821 = vmatpush.msra.mxu0 %v1820
    %v1822 = vand.u32 %v39, 4294901760
    %v1823 = vsub.f32 %v39, %v1822
    %v1824 = vand.u32 %v1823, 4294901760
    %1825 = vmatpush.msra.mxu0 %v1824
    %v1826 = vand.u32 %v37, 4294901760
    %v1827 = vsub.f32 %v37, %v1826
    %v1828 = vand.u32 %v1827, 4294901760
    %1829 = vmatpush.msra.mxu0 %v1828
    %v1830 = vand.u32 %v35, 4294901760
    %v1831 = vsub.f32 %v35, %v1830
    %v1832 = vand.u32 %v1831, 4294901760
    %1833 = vmatpush.msra.mxu0 %v1832
    %v1834 = vand.u32 %v33, 4294901760
    %v1835 = vsub.f32 %v33, %v1834
    %v1836 = vand.u32 %v1835, 4294901760
    %1837 = vmatpush.msra.mxu0 %v1836
    %v1838 = vand.u32 %v162, 4294901760
    %1839 = vmatmul.f32.gmra.mxu0 %v1838
    %v1840 = vpop.f32.mrf.mxu0
    %v1841 = vadd.f32 %v1772, %v1840
    %1842 = vdwg.mxu0
    %v1843 = vand.u32 %v63, 4294901760
    %1844 = vmatpush.msra.mxu0 %v1843
    %v1845 = vand.u32 %v61, 4294901760
    %1846 = vmatpush.msra.mxu0 %v1845
    %v1847 = vand.u32 %v59, 4294901760
    %1848 = vmatpush.msra.mxu0 %v1847
    %v1849 = vand.u32 %v57, 4294901760
    %1850 = vmatpush.msra.mxu0 %v1849
    %v1851 = vand.u32 %v55, 4294901760
    %1852 = vmatpush.msra.mxu0 %v1851
    %v1853 = vand.u32 %v53, 4294901760
    %1854 = vmatpush.msra.mxu0 %v1853
    %v1855 = vand.u32 %v51, 4294901760
    %1856 = vmatpush.msra.mxu0 %v1855
    %v1857 = vand.u32 %v49, 4294901760
    %1858 = vmatpush.msra.mxu0 %v1857
    %v1859 = vand.u32 %v47, 4294901760
    %1860 = vmatpush.msra.mxu0 %v1859
    %v1861 = vand.u32 %v45, 4294901760
    %1862 = vmatpush.msra.mxu0 %v1861
    %v1863 = vand.u32 %v43, 4294901760
    %1864 = vmatpush.msra.mxu0 %v1863
    %v1865 = vand.u32 %v41, 4294901760
    %1866 = vmatpush.msra.mxu0 %v1865
    %v1867 = vand.u32 %v39, 4294901760
    %1868 = vmatpush.msra.mxu0 %v1867
    %v1869 = vand.u32 %v37, 4294901760
    %1870 = vmatpush.msra.mxu0 %v1869
    %v1871 = vand.u32 %v35, 4294901760
    %1872 = vmatpush.msra.mxu0 %v1871
    %v1873 = vand.u32 %v33, 4294901760
    %1874 = vmatpush.msra.mxu0 %v1873
    %v1875 = vand.u32 %v162, 4294901760
    %1876 = vmatmul.f32.gmra.mxu0 %v1875
    %v1877 = vpop.f32.mrf.mxu0
    %v1878 = vadd.f32 %v1841, %v1877
    %1879 = vdwg.mxu0
    %v1880 = vand.u32 %v95, 4294901760
    %1881 = vmatpush.msra.mxu0 %v1880
    %v1882 = vand.u32 %v93, 4294901760
    %1883 = vmatpush.msra.mxu0 %v1882
    %v1884 = vand.u32 %v91, 4294901760
    %1885 = vmatpush.msra.mxu0 %v1884
    %v1886 = vand.u32 %v89, 4294901760
    %1887 = vmatpush.msra.mxu0 %v1886
    %v1888 = vand.u32 %v87, 4294901760
    %1889 = vmatpush.msra.mxu0 %v1888
    %v1890 = vand.u32 %v85, 4294901760
    %1891 = vmatpush.msra.mxu0 %v1890
    %v1892 = vand.u32 %v83, 4294901760
    %1893 = vmatpush.msra.mxu0 %v1892
    %v1894 = vand.u32 %v81, 4294901760
    %1895 = vmatpush.msra.mxu0 %v1894
    %v1896 = vand.u32 %v79, 4294901760
    %1897 = vmatpush.msra.mxu0 %v1896
    %v1898 = vand.u32 %v77, 4294901760
    %1899 = vmatpush.msra.mxu0 %v1898
    %v1900 = vand.u32 %v75, 4294901760
    %1901 = vmatpush.msra.mxu0 %v1900
    %v1902 = vand.u32 %v73, 4294901760
    %1903 = vmatpush.msra.mxu0 %v1902
    %v1904 = vand.u32 %v71, 4294901760
    %1905 = vmatpush.msra.mxu0 %v1904
    %v1906 = vand.u32 %v69, 4294901760
    %1907 = vmatpush.msra.mxu0 %v1906
    %v1908 = vand.u32 %v67, 4294901760
    %1909 = vmatpush.msra.mxu0 %v1908
    %v1910 = vand.u32 %v65, 4294901760
    %1911 = vmatpush.msra.mxu0 %v1910
    %v1912 = vand.u32 %v163, 4294901760
    %v1913 = vsub.f32 %v163, %v1912
    %v1914 = vand.u32 %v1913, 4294901760
    %v1915 = vsub.f32 %v1913, %v1914
    %v1916 = vand.u32 %v1915, 4294901760
    %1917 = vmatmul.f32.gmra.mxu0 %v1916
    %v1918 = vpop.f32.mrf.mxu0
    %v1919 = vadd.f32 %v1878, %v1918
    %1920 = vdwg.mxu0
    %v1921 = vand.u32 %v95, 4294901760
    %v1922 = vsub.f32 %v95, %v1921
    %v1923 = vand.u32 %v1922, 4294901760
    %v1924 = vsub.f32 %v1922, %v1923
    %v1925 = vand.u32 %v1924, 4294901760
    %1926 = vmatpush.msra.mxu0 %v1925
    %v1927 = vand.u32 %v93, 4294901760
    %v1928 = vsub.f32 %v93, %v1927
    %v1929 = vand.u32 %v1928, 4294901760
    %v1930 = vsub.f32 %v1928, %v1929
    %v1931 = vand.u32 %v1930, 4294901760
    %1932 = vmatpush.msra.mxu0 %v1931
    %v1933 = vand.u32 %v91, 4294901760
    %v1934 = vsub.f32 %v91, %v1933
    %v1935 = vand.u32 %v1934, 4294901760
    %v1936 = vsub.f32 %v1934, %v1935
    %v1937 = vand.u32 %v1936, 4294901760
    %1938 = vmatpush.msra.mxu0 %v1937
    %v1939 = vand.u32 %v89, 4294901760
    %v1940 = vsub.f32 %v89, %v1939
    %v1941 = vand.u32 %v1940, 4294901760
    %v1942 = vsub.f32 %v1940, %v1941
    %v1943 = vand.u32 %v1942, 4294901760
    %1944 = vmatpush.msra.mxu0 %v1943
    %v1945 = vand.u32 %v87, 4294901760
    %v1946 = vsub.f32 %v87, %v1945
    %v1947 = vand.u32 %v1946, 4294901760
    %v1948 = vsub.f32 %v1946, %v1947
    %v1949 = vand.u32 %v1948, 4294901760
    %1950 = vmatpush.msra.mxu0 %v1949
    %v1951 = vand.u32 %v85, 4294901760
    %v1952 = vsub.f32 %v85, %v1951
    %v1953 = vand.u32 %v1952, 4294901760
    %v1954 = vsub.f32 %v1952, %v1953
    %v1955 = vand.u32 %v1954, 4294901760
    %1956 = vmatpush.msra.mxu0 %v1955
    %v1957 = vand.u32 %v83, 4294901760
    %v1958 = vsub.f32 %v83, %v1957
    %v1959 = vand.u32 %v1958, 4294901760
    %v1960 = vsub.f32 %v1958, %v1959
    %v1961 = vand.u32 %v1960, 4294901760
    %1962 = vmatpush.msra.mxu0 %v1961
    %v1963 = vand.u32 %v81, 4294901760
    %v1964 = vsub.f32 %v81, %v1963
    %v1965 = vand.u32 %v1964, 4294901760
    %v1966 = vsub.f32 %v1964, %v1965
    %v1967 = vand.u32 %v1966, 4294901760
    %1968 = vmatpush.msra.mxu0 %v1967
    %v1969 = vand.u32 %v79, 4294901760
    %v1970 = vsub.f32 %v79, %v1969
    %v1971 = vand.u32 %v1970, 4294901760
    %v1972 = vsub.f32 %v1970, %v1971
    %v1973 = vand.u32 %v1972, 4294901760
    %1974 = vmatpush.msra.mxu0 %v1973
    %v1975 = vand.u32 %v77, 4294901760
    %v1976 = vsub.f32 %v77, %v1975
    %v1977 = vand.u32 %v1976, 4294901760
    %v1978 = vsub.f32 %v1976, %v1977
    %v1979 = vand.u32 %v1978, 4294901760
    %1980 = vmatpush.msra.mxu0 %v1979
    %v1981 = vand.u32 %v75, 4294901760
    %v1982 = vsub.f32 %v75, %v1981
    %v1983 = vand.u32 %v1982, 4294901760
    %v1984 = vsub.f32 %v1982, %v1983
    %v1985 = vand.u32 %v1984, 4294901760
    %1986 = vmatpush.msra.mxu0 %v1985
    %v1987 = vand.u32 %v73, 4294901760
    %v1988 = vsub.f32 %v73, %v1987
    %v1989 = vand.u32 %v1988, 4294901760
    %v1990 = vsub.f32 %v1988, %v1989
    %v1991 = vand.u32 %v1990, 4294901760
    %1992 = vmatpush.msra.mxu0 %v1991
    %v1993 = vand.u32 %v71, 4294901760
    %v1994 = vsub.f32 %v71, %v1993
    %v1995 = vand.u32 %v1994, 4294901760
    %v1996 = vsub.f32 %v1994, %v1995
    %v1997 = vand.u32 %v1996, 4294901760
    %1998 = vmatpush.msra.mxu0 %v1997
    %v1999 = vand.u32 %v69, 4294901760
    %v2000 = vsub.f32 %v69, %v1999
    %v2001 = vand.u32 %v2000, 4294901760
    %v2002 = vsub.f32 %v2000, %v2001
    %v2003 = vand.u32 %v2002, 4294901760
    %2004 = vmatpush.msra.mxu0 %v2003
    %v2005 = vand.u32 %v67, 4294901760
    %v2006 = vsub.f32 %v67, %v2005
    %v2007 = vand.u32 %v2006, 4294901760
    %v2008 = vsub.f32 %v2006, %v2007
    %v2009 = vand.u32 %v2008, 4294901760
    %2010 = vmatpush.msra.mxu0 %v2009
    %v2011 = vand.u32 %v65, 4294901760
    %v2012 = vsub.f32 %v65, %v2011
    %v2013 = vand.u32 %v2012, 4294901760
    %v2014 = vsub.f32 %v2012, %v2013
    %v2015 = vand.u32 %v2014, 4294901760
    %2016 = vmatpush.msra.mxu0 %v2015
    %v2017 = vand.u32 %v163, 4294901760
    %2018 = vmatmul.f32.gmra.mxu0 %v2017
    %v2019 = vpop.f32.mrf.mxu0
    %v2020 = vadd.f32 %v1919, %v2019
    %2021 = vdwg.mxu0
    %v2022 = vand.u32 %v95, 4294901760
    %v2023 = vsub.f32 %v95, %v2022
    %2024 = vmatpush.msra.mxu0 %v2023
    %v2025 = vand.u32 %v93, 4294901760
    %v2026 = vsub.f32 %v93, %v2025
    %2027 = vmatpush.msra.mxu0 %v2026
    %v2028 = vand.u32 %v91, 4294901760
    %v2029 = vsub.f32 %v91, %v2028
    %2030 = vmatpush.msra.mxu0 %v2029
    %v2031 = vand.u32 %v89, 4294901760
    %v2032 = vsub.f32 %v89, %v2031
    %2033 = vmatpush.msra.mxu0 %v2032
    %v2034 = vand.u32 %v87, 4294901760
    %v2035 = vsub.f32 %v87, %v2034
    %2036 = vmatpush.msra.mxu0 %v2035
    %v2037 = vand.u32 %v85, 4294901760
    %v2038 = vsub.f32 %v85, %v2037
    %2039 = vmatpush.msra.mxu0 %v2038
    %v2040 = vand.u32 %v83, 4294901760
    %v2041 = vsub.f32 %v83, %v2040
    %2042 = vmatpush.msra.mxu0 %v2041
    %v2043 = vand.u32 %v81, 4294901760
    %v2044 = vsub.f32 %v81, %v2043
    %2045 = vmatpush.msra.mxu0 %v2044
    %v2046 = vand.u32 %v79, 4294901760
    %v2047 = vsub.f32 %v79, %v2046
    %2048 = vmatpush.msra.mxu0 %v2047
    %v2049 = vand.u32 %v77, 4294901760
    %v2050 = vsub.f32 %v77, %v2049
    %2051 = vmatpush.msra.mxu0 %v2050
    %v2052 = vand.u32 %v75, 4294901760
    %v2053 = vsub.f32 %v75, %v2052
    %2054 = vmatpush.msra.mxu0 %v2053
    %v2055 = vand.u32 %v73, 4294901760
    %v2056 = vsub.f32 %v73, %v2055
    %2057 = vmatpush.msra.mxu0 %v2056
    %v2058 = vand.u32 %v71, 4294901760
    %v2059 = vsub.f32 %v71, %v2058
    %2060 = vmatpush.msra.mxu0 %v2059
    %v2061 = vand.u32 %v69, 4294901760
    %v2062 = vsub.f32 %v69, %v2061
    %2063 = vmatpush.msra.mxu0 %v2062
    %v2064 = vand.u32 %v67, 4294901760
    %v2065 = vsub.f32 %v67, %v2064
    %2066 = vmatpush.msra.mxu0 %v2065
    %v2067 = vand.u32 %v65, 4294901760
    %v2068 = vsub.f32 %v65, %v2067
    %2069 = vmatpush.msra.mxu0 %v2068
    %v2070 = vand.u32 %v163, 4294901760
    %v2071 = vsub.f32 %v163, %v2070
    %2072 = vmatmul.f32.gmra.mxu0 %v2071
    %v2073 = vpop.f32.mrf.mxu0
    %v2074 = vadd.f32 %v2020, %v2073
    %2075 = vdwg.mxu0
    %v2076 = vand.u32 %v95, 4294901760
    %2077 = vmatpush.msra.mxu0 %v2076
    %v2078 = vand.u32 %v93, 4294901760
    %2079 = vmatpush.msra.mxu0 %v2078
    %v2080 = vand.u32 %v91, 4294901760
    %2081 = vmatpush.msra.mxu0 %v2080
    %v2082 = vand.u32 %v89, 4294901760
    %2083 = vmatpush.msra.mxu0 %v2082
    %v2084 = vand.u32 %v87, 4294901760
    %2085 = vmatpush.msra.mxu0 %v2084
    %v2086 = vand.u32 %v85, 4294901760
    %2087 = vmatpush.msra.mxu0 %v2086
    %v2088 = vand.u32 %v83, 4294901760
    %2089 = vmatpush.msra.mxu0 %v2088
    %v2090 = vand.u32 %v81, 4294901760
    %2091 = vmatpush.msra.mxu0 %v2090
    %v2092 = vand.u32 %v79, 4294901760
    %2093 = vmatpush.msra.mxu0 %v2092
    %v2094 = vand.u32 %v77, 4294901760
    %2095 = vmatpush.msra.mxu0 %v2094
    %v2096 = vand.u32 %v75, 4294901760
    %2097 = vmatpush.msra.mxu0 %v2096
    %v2098 = vand.u32 %v73, 4294901760
    %2099 = vmatpush.msra.mxu0 %v2098
    %v2100 = vand.u32 %v71, 4294901760
    %2101 = vmatpush.msra.mxu0 %v2100
    %v2102 = vand.u32 %v69, 4294901760
    %2103 = vmatpush.msra.mxu0 %v2102
    %v2104 = vand.u32 %v67, 4294901760
    %2105 = vmatpush.msra.mxu0 %v2104
    %v2106 = vand.u32 %v65, 4294901760
    %2107 = vmatpush.msra.mxu0 %v2106
    %v2108 = vand.u32 %v163, 4294901760
    %v2109 = vsub.f32 %v163, %v2108
    %v2110 = vand.u32 %v2109, 4294901760
    %2111 = vmatmul.f32.gmra.mxu0 %v2110
    %v2112 = vpop.f32.mrf.mxu0
    %v2113 = vadd.f32 %v2074, %v2112
    %2114 = vdwg.mxu0
    %v2115 = vand.u32 %v95, 4294901760
    %v2116 = vsub.f32 %v95, %v2115
    %v2117 = vand.u32 %v2116, 4294901760
    %2118 = vmatpush.msra.mxu0 %v2117
    %v2119 = vand.u32 %v93, 4294901760
    %v2120 = vsub.f32 %v93, %v2119
    %v2121 = vand.u32 %v2120, 4294901760
    %2122 = vmatpush.msra.mxu0 %v2121
    %v2123 = vand.u32 %v91, 4294901760
    %v2124 = vsub.f32 %v91, %v2123
    %v2125 = vand.u32 %v2124, 4294901760
    %2126 = vmatpush.msra.mxu0 %v2125
    %v2127 = vand.u32 %v89, 4294901760
    %v2128 = vsub.f32 %v89, %v2127
    %v2129 = vand.u32 %v2128, 4294901760
    %2130 = vmatpush.msra.mxu0 %v2129
    %v2131 = vand.u32 %v87, 4294901760
    %v2132 = vsub.f32 %v87, %v2131
    %v2133 = vand.u32 %v2132, 4294901760
    %2134 = vmatpush.msra.mxu0 %v2133
    %v2135 = vand.u32 %v85, 4294901760
    %v2136 = vsub.f32 %v85, %v2135
    %v2137 = vand.u32 %v2136, 4294901760
    %2138 = vmatpush.msra.mxu0 %v2137
    %v2139 = vand.u32 %v83, 4294901760
    %v2140 = vsub.f32 %v83, %v2139
    %v2141 = vand.u32 %v2140, 4294901760
    %2142 = vmatpush.msra.mxu0 %v2141
    %v2143 = vand.u32 %v81, 4294901760
    %v2144 = vsub.f32 %v81, %v2143
    %v2145 = vand.u32 %v2144, 4294901760
    %2146 = vmatpush.msra.mxu0 %v2145
    %v2147 = vand.u32 %v79, 4294901760
    %v2148 = vsub.f32 %v79, %v2147
    %v2149 = vand.u32 %v2148, 4294901760
    %2150 = vmatpush.msra.mxu0 %v2149
    %v2151 = vand.u32 %v77, 4294901760
    %v2152 = vsub.f32 %v77, %v2151
    %v2153 = vand.u32 %v2152, 4294901760
    %2154 = vmatpush.msra.mxu0 %v2153
    %v2155 = vand.u32 %v75, 4294901760
    %v2156 = vsub.f32 %v75, %v2155
    %v2157 = vand.u32 %v2156, 4294901760
    %2158 = vmatpush.msra.mxu0 %v2157
    %v2159 = vand.u32 %v73, 4294901760
    %v2160 = vsub.f32 %v73, %v2159
    %v2161 = vand.u32 %v2160, 4294901760
    %2162 = vmatpush.msra.mxu0 %v2161
    %v2163 = vand.u32 %v71, 4294901760
    %v2164 = vsub.f32 %v71, %v2163
    %v2165 = vand.u32 %v2164, 4294901760
    %2166 = vmatpush.msra.mxu0 %v2165
    %v2167 = vand.u32 %v69, 4294901760
    %v2168 = vsub.f32 %v69, %v2167
    %v2169 = vand.u32 %v2168, 4294901760
    %2170 = vmatpush.msra.mxu0 %v2169
    %v2171 = vand.u32 %v67, 4294901760
    %v2172 = vsub.f32 %v67, %v2171
    %v2173 = vand.u32 %v2172, 4294901760
    %2174 = vmatpush.msra.mxu0 %v2173
    %v2175 = vand.u32 %v65, 4294901760
    %v2176 = vsub.f32 %v65, %v2175
    %v2177 = vand.u32 %v2176, 4294901760
    %2178 = vmatpush.msra.mxu0 %v2177
    %v2179 = vand.u32 %v163, 4294901760
    %2180 = vmatmul.f32.gmra.mxu0 %v2179
    %v2181 = vpop.f32.mrf.mxu0
    %v2182 = vadd.f32 %v2113, %v2181
    %2183 = vdwg.mxu0
    %v2184 = vand.u32 %v95, 4294901760
    %2185 = vmatpush.msra.mxu0 %v2184
    %v2186 = vand.u32 %v93, 4294901760
    %2187 = vmatpush.msra.mxu0 %v2186
    %v2188 = vand.u32 %v91, 4294901760
    %2189 = vmatpush.msra.mxu0 %v2188
    %v2190 = vand.u32 %v89, 4294901760
    %2191 = vmatpush.msra.mxu0 %v2190
    %v2192 = vand.u32 %v87, 4294901760
    %2193 = vmatpush.msra.mxu0 %v2192
    %v2194 = vand.u32 %v85, 4294901760
    %2195 = vmatpush.msra.mxu0 %v2194
    %v2196 = vand.u32 %v83, 4294901760
    %2197 = vmatpush.msra.mxu0 %v2196
    %v2198 = vand.u32 %v81, 4294901760
    %2199 = vmatpush.msra.mxu0 %v2198
    %v2200 = vand.u32 %v79, 4294901760
    %2201 = vmatpush.msra.mxu0 %v2200
    %v2202 = vand.u32 %v77, 4294901760
    %2203 = vmatpush.msra.mxu0 %v2202
    %v2204 = vand.u32 %v75, 4294901760
    %2205 = vmatpush.msra.mxu0 %v2204
    %v2206 = vand.u32 %v73, 4294901760
    %2207 = vmatpush.msra.mxu0 %v2206
    %v2208 = vand.u32 %v71, 4294901760
    %2209 = vmatpush.msra.mxu0 %v2208
    %v2210 = vand.u32 %v69, 4294901760
    %2211 = vmatpush.msra.mxu0 %v2210
    %v2212 = vand.u32 %v67, 4294901760
    %2213 = vmatpush.msra.mxu0 %v2212
    %v2214 = vand.u32 %v65, 4294901760
    %2215 = vmatpush.msra.mxu0 %v2214
    %v2216 = vand.u32 %v163, 4294901760
    %2217 = vmatmul.f32.gmra.mxu0 %v2216
    %v2218 = vpop.f32.mrf.mxu0
    %v2219 = vadd.f32 %v2182, %v2218
    %2220 = vdwg.mxu0
    %v2221 = vand.u32 %v127, 4294901760
    %2222 = vmatpush.msra.mxu0 %v2221
    %v2223 = vand.u32 %v125, 4294901760
    %2224 = vmatpush.msra.mxu0 %v2223
    %v2225 = vand.u32 %v123, 4294901760
    %2226 = vmatpush.msra.mxu0 %v2225
    %v2227 = vand.u32 %v121, 4294901760
    %2228 = vmatpush.msra.mxu0 %v2227
    %v2229 = vand.u32 %v119, 4294901760
    %2230 = vmatpush.msra.mxu0 %v2229
    %v2231 = vand.u32 %v117, 4294901760
    %2232 = vmatpush.msra.mxu0 %v2231
    %v2233 = vand.u32 %v115, 4294901760
    %2234 = vmatpush.msra.mxu0 %v2233
    %v2235 = vand.u32 %v113, 4294901760
    %2236 = vmatpush.msra.mxu0 %v2235
    %v2237 = vand.u32 %v111, 4294901760
    %2238 = vmatpush.msra.mxu0 %v2237
    %v2239 = vand.u32 %v109, 4294901760
    %2240 = vmatpush.msra.mxu0 %v2239
    %v2241 = vand.u32 %v107, 4294901760
    %2242 = vmatpush.msra.mxu0 %v2241
    %v2243 = vand.u32 %v105, 4294901760
    %2244 = vmatpush.msra.mxu0 %v2243
    %v2245 = vand.u32 %v103, 4294901760
    %2246 = vmatpush.msra.mxu0 %v2245
    %v2247 = vand.u32 %v101, 4294901760
    %2248 = vmatpush.msra.mxu0 %v2247
    %v2249 = vand.u32 %v99, 4294901760
    %2250 = vmatpush.msra.mxu0 %v2249
    %v2251 = vand.u32 %v97, 4294901760
    %2252 = vmatpush.msra.mxu0 %v2251
    %v2253 = vand.u32 %v164, 4294901760
    %v2254 = vsub.f32 %v164, %v2253
    %v2255 = vand.u32 %v2254, 4294901760
    %v2256 = vsub.f32 %v2254, %v2255
    %v2257 = vand.u32 %v2256, 4294901760
    %2258 = vmatmul.f32.gmra.mxu0 %v2257
    %v2259 = vpop.f32.mrf.mxu0
    %v2260 = vadd.f32 %v2219, %v2259
    %2261 = vdwg.mxu0
    %v2262 = vand.u32 %v127, 4294901760
    %v2263 = vsub.f32 %v127, %v2262
    %v2264 = vand.u32 %v2263, 4294901760
    %v2265 = vsub.f32 %v2263, %v2264
    %v2266 = vand.u32 %v2265, 4294901760
    %2267 = vmatpush.msra.mxu0 %v2266
    %v2268 = vand.u32 %v125, 4294901760
    %v2269 = vsub.f32 %v125, %v2268
    %v2270 = vand.u32 %v2269, 4294901760
    %v2271 = vsub.f32 %v2269, %v2270
    %v2272 = vand.u32 %v2271, 4294901760
    %2273 = vmatpush.msra.mxu0 %v2272
    %v2274 = vand.u32 %v123, 4294901760
    %v2275 = vsub.f32 %v123, %v2274
    %v2276 = vand.u32 %v2275, 4294901760
    %v2277 = vsub.f32 %v2275, %v2276
    %v2278 = vand.u32 %v2277, 4294901760
    %2279 = vmatpush.msra.mxu0 %v2278
    %v2280 = vand.u32 %v121, 4294901760
    %v2281 = vsub.f32 %v121, %v2280
    %v2282 = vand.u32 %v2281, 4294901760
    %v2283 = vsub.f32 %v2281, %v2282
    %v2284 = vand.u32 %v2283, 4294901760
    %2285 = vmatpush.msra.mxu0 %v2284
    %v2286 = vand.u32 %v119, 4294901760
    %v2287 = vsub.f32 %v119, %v2286
    %v2288 = vand.u32 %v2287, 4294901760
    %v2289 = vsub.f32 %v2287, %v2288
    %v2290 = vand.u32 %v2289, 4294901760
    %2291 = vmatpush.msra.mxu0 %v2290
    %v2292 = vand.u32 %v117, 4294901760
    %v2293 = vsub.f32 %v117, %v2292
    %v2294 = vand.u32 %v2293, 4294901760
    %v2295 = vsub.f32 %v2293, %v2294
    %v2296 = vand.u32 %v2295, 4294901760
    %2297 = vmatpush.msra.mxu0 %v2296
    %v2298 = vand.u32 %v115, 4294901760
    %v2299 = vsub.f32 %v115, %v2298
    %v2300 = vand.u32 %v2299, 4294901760
    %v2301 = vsub.f32 %v2299, %v2300
    %v2302 = vand.u32 %v2301, 4294901760
    %2303 = vmatpush.msra.mxu0 %v2302
    %v2304 = vand.u32 %v113, 4294901760
    %v2305 = vsub.f32 %v113, %v2304
    %v2306 = vand.u32 %v2305, 4294901760
    %v2307 = vsub.f32 %v2305, %v2306
    %v2308 = vand.u32 %v2307, 4294901760
    %2309 = vmatpush.msra.mxu0 %v2308
    %v2310 = vand.u32 %v111, 4294901760
    %v2311 = vsub.f32 %v111, %v2310
    %v2312 = vand.u32 %v2311, 4294901760
    %v2313 = vsub.f32 %v2311, %v2312
    %v2314 = vand.u32 %v2313, 4294901760
    %2315 = vmatpush.msra.mxu0 %v2314
    %v2316 = vand.u32 %v109, 4294901760
    %v2317 = vsub.f32 %v109, %v2316
    %v2318 = vand.u32 %v2317, 4294901760
    %v2319 = vsub.f32 %v2317, %v2318
    %v2320 = vand.u32 %v2319, 4294901760
    %2321 = vmatpush.msra.mxu0 %v2320
    %v2322 = vand.u32 %v107, 4294901760
    %v2323 = vsub.f32 %v107, %v2322
    %v2324 = vand.u32 %v2323, 4294901760
    %v2325 = vsub.f32 %v2323, %v2324
    %v2326 = vand.u32 %v2325, 4294901760
    %2327 = vmatpush.msra.mxu0 %v2326
    %v2328 = vand.u32 %v105, 4294901760
    %v2329 = vsub.f32 %v105, %v2328
    %v2330 = vand.u32 %v2329, 4294901760
    %v2331 = vsub.f32 %v2329, %v2330
    %v2332 = vand.u32 %v2331, 4294901760
    %2333 = vmatpush.msra.mxu0 %v2332
    %v2334 = vand.u32 %v103, 4294901760
    %v2335 = vsub.f32 %v103, %v2334
    %v2336 = vand.u32 %v2335, 4294901760
    %v2337 = vsub.f32 %v2335, %v2336
    %v2338 = vand.u32 %v2337, 4294901760
    %2339 = vmatpush.msra.mxu0 %v2338
    %v2340 = vand.u32 %v101, 4294901760
    %v2341 = vsub.f32 %v101, %v2340
    %v2342 = vand.u32 %v2341, 4294901760
    %v2343 = vsub.f32 %v2341, %v2342
    %v2344 = vand.u32 %v2343, 4294901760
    %2345 = vmatpush.msra.mxu0 %v2344
    %v2346 = vand.u32 %v99, 4294901760
    %v2347 = vsub.f32 %v99, %v2346
    %v2348 = vand.u32 %v2347, 4294901760
    %v2349 = vsub.f32 %v2347, %v2348
    %v2350 = vand.u32 %v2349, 4294901760
    %2351 = vmatpush.msra.mxu0 %v2350
    %v2352 = vand.u32 %v97, 4294901760
    %v2353 = vsub.f32 %v97, %v2352
    %v2354 = vand.u32 %v2353, 4294901760
    %v2355 = vsub.f32 %v2353, %v2354
    %v2356 = vand.u32 %v2355, 4294901760
    %2357 = vmatpush.msra.mxu0 %v2356
    %v2358 = vand.u32 %v164, 4294901760
    %2359 = vmatmul.f32.gmra.mxu0 %v2358
    %v2360 = vpop.f32.mrf.mxu0
    %v2361 = vadd.f32 %v2260, %v2360
    %2362 = vdwg.mxu0
    %v2363 = vand.u32 %v127, 4294901760
    %v2364 = vsub.f32 %v127, %v2363
    %2365 = vmatpush.msra.mxu0 %v2364
    %v2366 = vand.u32 %v125, 4294901760
    %v2367 = vsub.f32 %v125, %v2366
    %2368 = vmatpush.msra.mxu0 %v2367
    %v2369 = vand.u32 %v123, 4294901760
    %v2370 = vsub.f32 %v123, %v2369
    %2371 = vmatpush.msra.mxu0 %v2370
    %v2372 = vand.u32 %v121, 4294901760
    %v2373 = vsub.f32 %v121, %v2372
    %2374 = vmatpush.msra.mxu0 %v2373
    %v2375 = vand.u32 %v119, 4294901760
    %v2376 = vsub.f32 %v119, %v2375
    %2377 = vmatpush.msra.mxu0 %v2376
    %v2378 = vand.u32 %v117, 4294901760
    %v2379 = vsub.f32 %v117, %v2378
    %2380 = vmatpush.msra.mxu0 %v2379
    %v2381 = vand.u32 %v115, 4294901760
    %v2382 = vsub.f32 %v115, %v2381
    %2383 = vmatpush.msra.mxu0 %v2382
    %v2384 = vand.u32 %v113, 4294901760
    %v2385 = vsub.f32 %v113, %v2384
    %2386 = vmatpush.msra.mxu0 %v2385
    %v2387 = vand.u32 %v111, 4294901760
    %v2388 = vsub.f32 %v111, %v2387
    %2389 = vmatpush.msra.mxu0 %v2388
    %v2390 = vand.u32 %v109, 4294901760
    %v2391 = vsub.f32 %v109, %v2390
    %2392 = vmatpush.msra.mxu0 %v2391
    %v2393 = vand.u32 %v107, 4294901760
    %v2394 = vsub.f32 %v107, %v2393
    %2395 = vmatpush.msra.mxu0 %v2394
    %v2396 = vand.u32 %v105, 4294901760
    %v2397 = vsub.f32 %v105, %v2396
    %2398 = vmatpush.msra.mxu0 %v2397
    %v2399 = vand.u32 %v103, 4294901760
    %v2400 = vsub.f32 %v103, %v2399
    %2401 = vmatpush.msra.mxu0 %v2400
    %v2402 = vand.u32 %v101, 4294901760
    %v2403 = vsub.f32 %v101, %v2402
    %2404 = vmatpush.msra.mxu0 %v2403
    %v2405 = vand.u32 %v99, 4294901760
    %v2406 = vsub.f32 %v99, %v2405
    %2407 = vmatpush.msra.mxu0 %v2406
    %v2408 = vand.u32 %v97, 4294901760
    %v2409 = vsub.f32 %v97, %v2408
    %2410 = vmatpush.msra.mxu0 %v2409
    %v2411 = vand.u32 %v164, 4294901760
    %v2412 = vsub.f32 %v164, %v2411
    %2413 = vmatmul.f32.gmra.mxu0 %v2412
    %v2414 = vpop.f32.mrf.mxu0
    %v2415 = vadd.f32 %v2361, %v2414
    %2416 = vdwg.mxu0
    %v2417 = vand.u32 %v127, 4294901760
    %2418 = vmatpush.msra.mxu0 %v2417
    %v2419 = vand.u32 %v125, 4294901760
    %2420 = vmatpush.msra.mxu0 %v2419
    %v2421 = vand.u32 %v123, 4294901760
    %2422 = vmatpush.msra.mxu0 %v2421
    %v2423 = vand.u32 %v121, 4294901760
    %2424 = vmatpush.msra.mxu0 %v2423
    %v2425 = vand.u32 %v119, 4294901760
    %2426 = vmatpush.msra.mxu0 %v2425
    %v2427 = vand.u32 %v117, 4294901760
    %2428 = vmatpush.msra.mxu0 %v2427
    %v2429 = vand.u32 %v115, 4294901760
    %2430 = vmatpush.msra.mxu0 %v2429
    %v2431 = vand.u32 %v113, 4294901760
    %2432 = vmatpush.msra.mxu0 %v2431
    %v2433 = vand.u32 %v111, 4294901760
    %2434 = vmatpush.msra.mxu0 %v2433
    %v2435 = vand.u32 %v109, 4294901760
    %2436 = vmatpush.msra.mxu0 %v2435
    %v2437 = vand.u32 %v107, 4294901760
    %2438 = vmatpush.msra.mxu0 %v2437
    %v2439 = vand.u32 %v105, 4294901760
    %2440 = vmatpush.msra.mxu0 %v2439
    %v2441 = vand.u32 %v103, 4294901760
    %2442 = vmatpush.msra.mxu0 %v2441
    %v2443 = vand.u32 %v101, 4294901760
    %2444 = vmatpush.msra.mxu0 %v2443
    %v2445 = vand.u32 %v99, 4294901760
    %2446 = vmatpush.msra.mxu0 %v2445
    %v2447 = vand.u32 %v97, 4294901760
    %2448 = vmatpush.msra.mxu0 %v2447
    %v2449 = vand.u32 %v164, 4294901760
    %v2450 = vsub.f32 %v164, %v2449
    %v2451 = vand.u32 %v2450, 4294901760
    %2452 = vmatmul.f32.gmra.mxu0 %v2451
    %v2453 = vpop.f32.mrf.mxu0
    %v2454 = vadd.f32 %v2415, %v2453
    %2455 = vdwg.mxu0
    %v2456 = vand.u32 %v127, 4294901760
    %v2457 = vsub.f32 %v127, %v2456
    %v2458 = vand.u32 %v2457, 4294901760
    %2459 = vmatpush.msra.mxu0 %v2458
    %v2460 = vand.u32 %v125, 4294901760
    %v2461 = vsub.f32 %v125, %v2460
    %v2462 = vand.u32 %v2461, 4294901760
    %2463 = vmatpush.msra.mxu0 %v2462
    %v2464 = vand.u32 %v123, 4294901760
    %v2465 = vsub.f32 %v123, %v2464
    %v2466 = vand.u32 %v2465, 4294901760
    %2467 = vmatpush.msra.mxu0 %v2466
    %v2468 = vand.u32 %v121, 4294901760
    %v2469 = vsub.f32 %v121, %v2468
    %v2470 = vand.u32 %v2469, 4294901760
    %2471 = vmatpush.msra.mxu0 %v2470
    %v2472 = vand.u32 %v119, 4294901760
    %v2473 = vsub.f32 %v119, %v2472
    %v2474 = vand.u32 %v2473, 4294901760
    %2475 = vmatpush.msra.mxu0 %v2474
    %v2476 = vand.u32 %v117, 4294901760
    %v2477 = vsub.f32 %v117, %v2476
    %v2478 = vand.u32 %v2477, 4294901760
    %2479 = vmatpush.msra.mxu0 %v2478
    %v2480 = vand.u32 %v115, 4294901760
    %v2481 = vsub.f32 %v115, %v2480
    %v2482 = vand.u32 %v2481, 4294901760
    %2483 = vmatpush.msra.mxu0 %v2482
    %v2484 = vand.u32 %v113, 4294901760
    %v2485 = vsub.f32 %v113, %v2484
    %v2486 = vand.u32 %v2485, 4294901760
    %2487 = vmatpush.msra.mxu0 %v2486
    %v2488 = vand.u32 %v111, 4294901760
    %v2489 = vsub.f32 %v111, %v2488
    %v2490 = vand.u32 %v2489, 4294901760
    %2491 = vmatpush.msra.mxu0 %v2490
    %v2492 = vand.u32 %v109, 4294901760
    %v2493 = vsub.f32 %v109, %v2492
    %v2494 = vand.u32 %v2493, 4294901760
    %2495 = vmatpush.msra.mxu0 %v2494
    %v2496 = vand.u32 %v107, 4294901760
    %v2497 = vsub.f32 %v107, %v2496
    %v2498 = vand.u32 %v2497, 4294901760
    %2499 = vmatpush.msra.mxu0 %v2498
    %v2500 = vand.u32 %v105, 4294901760
    %v2501 = vsub.f32 %v105, %v2500
    %v2502 = vand.u32 %v2501, 4294901760
    %2503 = vmatpush.msra.mxu0 %v2502
    %v2504 = vand.u32 %v103, 4294901760
    %v2505 = vsub.f32 %v103, %v2504
    %v2506 = vand.u32 %v2505, 4294901760
    %2507 = vmatpush.msra.mxu0 %v2506
    %v2508 = vand.u32 %v101, 4294901760
    %v2509 = vsub.f32 %v101, %v2508
    %v2510 = vand.u32 %v2509, 4294901760
    %2511 = vmatpush.msra.mxu0 %v2510
    %v2512 = vand.u32 %v99, 4294901760
    %v2513 = vsub.f32 %v99, %v2512
    %v2514 = vand.u32 %v2513, 4294901760
    %2515 = vmatpush.msra.mxu0 %v2514
    %v2516 = vand.u32 %v97, 4294901760
    %v2517 = vsub.f32 %v97, %v2516
    %v2518 = vand.u32 %v2517, 4294901760
    %2519 = vmatpush.msra.mxu0 %v2518
    %v2520 = vand.u32 %v164, 4294901760
    %2521 = vmatmul.f32.gmra.mxu0 %v2520
    %v2522 = vpop.f32.mrf.mxu0
    %v2523 = vadd.f32 %v2454, %v2522
    %2524 = vdwg.mxu0
    %v2525 = vand.u32 %v127, 4294901760
    %2526 = vmatpush.msra.mxu0 %v2525
    %v2527 = vand.u32 %v125, 4294901760
    %2528 = vmatpush.msra.mxu0 %v2527
    %v2529 = vand.u32 %v123, 4294901760
    %2530 = vmatpush.msra.mxu0 %v2529
    %v2531 = vand.u32 %v121, 4294901760
    %2532 = vmatpush.msra.mxu0 %v2531
    %v2533 = vand.u32 %v119, 4294901760
    %2534 = vmatpush.msra.mxu0 %v2533
    %v2535 = vand.u32 %v117, 4294901760
    %2536 = vmatpush.msra.mxu0 %v2535
    %v2537 = vand.u32 %v115, 4294901760
    %2538 = vmatpush.msra.mxu0 %v2537
    %v2539 = vand.u32 %v113, 4294901760
    %2540 = vmatpush.msra.mxu0 %v2539
    %v2541 = vand.u32 %v111, 4294901760
    %2542 = vmatpush.msra.mxu0 %v2541
    %v2543 = vand.u32 %v109, 4294901760
    %2544 = vmatpush.msra.mxu0 %v2543
    %v2545 = vand.u32 %v107, 4294901760
    %2546 = vmatpush.msra.mxu0 %v2545
    %v2547 = vand.u32 %v105, 4294901760
    %2548 = vmatpush.msra.mxu0 %v2547
    %v2549 = vand.u32 %v103, 4294901760
    %2550 = vmatpush.msra.mxu0 %v2549
    %v2551 = vand.u32 %v101, 4294901760
    %2552 = vmatpush.msra.mxu0 %v2551
    %v2553 = vand.u32 %v99, 4294901760
    %2554 = vmatpush.msra.mxu0 %v2553
    %v2555 = vand.u32 %v97, 4294901760
    %2556 = vmatpush.msra.mxu0 %v2555
    %v2557 = vand.u32 %v164, 4294901760
    %2558 = vmatmul.f32.gmra.mxu0 %v2557
    %v2559 = vpop.f32.mrf.mxu0
    %v2560 = vadd.f32 %v2523, %v2559
    %2561 = vdwg.mxu0
    %v2562 = vand.u32 %v159, 4294901760
    %2563 = vmatpush.msra.mxu0 %v2562
    %v2564 = vand.u32 %v157, 4294901760
    %2565 = vmatpush.msra.mxu0 %v2564
    %v2566 = vand.u32 %v155, 4294901760
    %2567 = vmatpush.msra.mxu0 %v2566
    %v2568 = vand.u32 %v153, 4294901760
    %2569 = vmatpush.msra.mxu0 %v2568
    %v2570 = vand.u32 %v151, 4294901760
    %2571 = vmatpush.msra.mxu0 %v2570
    %v2572 = vand.u32 %v149, 4294901760
    %2573 = vmatpush.msra.mxu0 %v2572
    %v2574 = vand.u32 %v147, 4294901760
    %2575 = vmatpush.msra.mxu0 %v2574
    %v2576 = vand.u32 %v145, 4294901760
    %2577 = vmatpush.msra.mxu0 %v2576
    %v2578 = vand.u32 %v143, 4294901760
    %2579 = vmatpush.msra.mxu0 %v2578
    %v2580 = vand.u32 %v141, 4294901760
    %2581 = vmatpush.msra.mxu0 %v2580
    %v2582 = vand.u32 %v139, 4294901760
    %2583 = vmatpush.msra.mxu0 %v2582
    %v2584 = vand.u32 %v137, 4294901760
    %2585 = vmatpush.msra.mxu0 %v2584
    %v2586 = vand.u32 %v135, 4294901760
    %2587 = vmatpush.msra.mxu0 %v2586
    %v2588 = vand.u32 %v133, 4294901760
    %2589 = vmatpush.msra.mxu0 %v2588
    %v2590 = vand.u32 %v131, 4294901760
    %2591 = vmatpush.msra.mxu0 %v2590
    %v2592 = vand.u32 %v129, 4294901760
    %2593 = vmatpush.msra.mxu0 %v2592
    %v2594 = vand.u32 %v165, 4294901760
    %v2595 = vsub.f32 %v165, %v2594
    %v2596 = vand.u32 %v2595, 4294901760
    %v2597 = vsub.f32 %v2595, %v2596
    %v2598 = vand.u32 %v2597, 4294901760
    %2599 = vmatmul.f32.gmra.mxu0 %v2598
    %v2600 = vpop.f32.mrf.mxu0
    %v2601 = vadd.f32 %v2560, %v2600
    %2602 = vdwg.mxu0
    %v2603 = vand.u32 %v159, 4294901760
    %v2604 = vsub.f32 %v159, %v2603
    %v2605 = vand.u32 %v2604, 4294901760
    %v2606 = vsub.f32 %v2604, %v2605
    %v2607 = vand.u32 %v2606, 4294901760
    %2608 = vmatpush.msra.mxu0 %v2607
    %v2609 = vand.u32 %v157, 4294901760
    %v2610 = vsub.f32 %v157, %v2609
    %v2611 = vand.u32 %v2610, 4294901760
    %v2612 = vsub.f32 %v2610, %v2611
    %v2613 = vand.u32 %v2612, 4294901760
    %2614 = vmatpush.msra.mxu0 %v2613
    %v2615 = vand.u32 %v155, 4294901760
    %v2616 = vsub.f32 %v155, %v2615
    %v2617 = vand.u32 %v2616, 4294901760
    %v2618 = vsub.f32 %v2616, %v2617
    %v2619 = vand.u32 %v2618, 4294901760
    %2620 = vmatpush.msra.mxu0 %v2619
    %v2621 = vand.u32 %v153, 4294901760
    %v2622 = vsub.f32 %v153, %v2621
    %v2623 = vand.u32 %v2622, 4294901760
    %v2624 = vsub.f32 %v2622, %v2623
    %v2625 = vand.u32 %v2624, 4294901760
    %2626 = vmatpush.msra.mxu0 %v2625
    %v2627 = vand.u32 %v151, 4294901760
    %v2628 = vsub.f32 %v151, %v2627
    %v2629 = vand.u32 %v2628, 4294901760
    %v2630 = vsub.f32 %v2628, %v2629
    %v2631 = vand.u32 %v2630, 4294901760
    %2632 = vmatpush.msra.mxu0 %v2631
    %v2633 = vand.u32 %v149, 4294901760
    %v2634 = vsub.f32 %v149, %v2633
    %v2635 = vand.u32 %v2634, 4294901760
    %v2636 = vsub.f32 %v2634, %v2635
    %v2637 = vand.u32 %v2636, 4294901760
    %2638 = vmatpush.msra.mxu0 %v2637
    %v2639 = vand.u32 %v147, 4294901760
    %v2640 = vsub.f32 %v147, %v2639
    %v2641 = vand.u32 %v2640, 4294901760
    %v2642 = vsub.f32 %v2640, %v2641
    %v2643 = vand.u32 %v2642, 4294901760
    %2644 = vmatpush.msra.mxu0 %v2643
    %v2645 = vand.u32 %v145, 4294901760
    %v2646 = vsub.f32 %v145, %v2645
    %v2647 = vand.u32 %v2646, 4294901760
    %v2648 = vsub.f32 %v2646, %v2647
    %v2649 = vand.u32 %v2648, 4294901760
    %2650 = vmatpush.msra.mxu0 %v2649
    %v2651 = vand.u32 %v143, 4294901760
    %v2652 = vsub.f32 %v143, %v2651
    %v2653 = vand.u32 %v2652, 4294901760
    %v2654 = vsub.f32 %v2652, %v2653
    %v2655 = vand.u32 %v2654, 4294901760
    %2656 = vmatpush.msra.mxu0 %v2655
    %v2657 = vand.u32 %v141, 4294901760
    %v2658 = vsub.f32 %v141, %v2657
    %v2659 = vand.u32 %v2658, 4294901760
    %v2660 = vsub.f32 %v2658, %v2659
    %v2661 = vand.u32 %v2660, 4294901760
    %2662 = vmatpush.msra.mxu0 %v2661
    %v2663 = vand.u32 %v139, 4294901760
    %v2664 = vsub.f32 %v139, %v2663
    %v2665 = vand.u32 %v2664, 4294901760
    %v2666 = vsub.f32 %v2664, %v2665
    %v2667 = vand.u32 %v2666, 4294901760
    %2668 = vmatpush.msra.mxu0 %v2667
    %v2669 = vand.u32 %v137, 4294901760
    %v2670 = vsub.f32 %v137, %v2669
    %v2671 = vand.u32 %v2670, 4294901760
    %v2672 = vsub.f32 %v2670, %v2671
    %v2673 = vand.u32 %v2672, 4294901760
    %2674 = vmatpush.msra.mxu0 %v2673
    %v2675 = vand.u32 %v135, 4294901760
    %v2676 = vsub.f32 %v135, %v2675
    %v2677 = vand.u32 %v2676, 4294901760
    %v2678 = vsub.f32 %v2676, %v2677
    %v2679 = vand.u32 %v2678, 4294901760
    %2680 = vmatpush.msra.mxu0 %v2679
    %v2681 = vand.u32 %v133, 4294901760
    %v2682 = vsub.f32 %v133, %v2681
    %v2683 = vand.u32 %v2682, 4294901760
    %v2684 = vsub.f32 %v2682, %v2683
    %v2685 = vand.u32 %v2684, 4294901760
    %2686 = vmatpush.msra.mxu0 %v2685
    %v2687 = vand.u32 %v131, 4294901760
    %v2688 = vsub.f32 %v131, %v2687
    %v2689 = vand.u32 %v2688, 4294901760
    %v2690 = vsub.f32 %v2688, %v2689
    %v2691 = vand.u32 %v2690, 4294901760
    %2692 = vmatpush.msra.mxu0 %v2691
    %v2693 = vand.u32 %v129, 4294901760
    %v2694 = vsub.f32 %v129, %v2693
    %v2695 = vand.u32 %v2694, 4294901760
    %v2696 = vsub.f32 %v2694, %v2695
    %v2697 = vand.u32 %v2696, 4294901760
    %2698 = vmatpush.msra.mxu0 %v2697
    %v2699 = vand.u32 %v165, 4294901760
    %2700 = vmatmul.f32.gmra.mxu0 %v2699
    %v2701 = vpop.f32.mrf.mxu0
    %v2702 = vadd.f32 %v2601, %v2701
    %2703 = vdwg.mxu0
    %v2704 = vand.u32 %v159, 4294901760
    %v2705 = vsub.f32 %v159, %v2704
    %2706 = vmatpush.msra.mxu0 %v2705
    %v2707 = vand.u32 %v157, 4294901760
    %v2708 = vsub.f32 %v157, %v2707
    %2709 = vmatpush.msra.mxu0 %v2708
    %v2710 = vand.u32 %v155, 4294901760
    %v2711 = vsub.f32 %v155, %v2710
    %2712 = vmatpush.msra.mxu0 %v2711
    %v2713 = vand.u32 %v153, 4294901760
    %v2714 = vsub.f32 %v153, %v2713
    %2715 = vmatpush.msra.mxu0 %v2714
    %v2716 = vand.u32 %v151, 4294901760
    %v2717 = vsub.f32 %v151, %v2716
    %2718 = vmatpush.msra.mxu0 %v2717
    %v2719 = vand.u32 %v149, 4294901760
    %v2720 = vsub.f32 %v149, %v2719
    %2721 = vmatpush.msra.mxu0 %v2720
    %v2722 = vand.u32 %v147, 4294901760
    %v2723 = vsub.f32 %v147, %v2722
    %2724 = vmatpush.msra.mxu0 %v2723
    %v2725 = vand.u32 %v145, 4294901760
    %v2726 = vsub.f32 %v145, %v2725
    %2727 = vmatpush.msra.mxu0 %v2726
    %v2728 = vand.u32 %v143, 4294901760
    %v2729 = vsub.f32 %v143, %v2728
    %2730 = vmatpush.msra.mxu0 %v2729
    %v2731 = vand.u32 %v141, 4294901760
    %v2732 = vsub.f32 %v141, %v2731
    %2733 = vmatpush.msra.mxu0 %v2732
    %v2734 = vand.u32 %v139, 4294901760
    %v2735 = vsub.f32 %v139, %v2734
    %2736 = vmatpush.msra.mxu0 %v2735
    %v2737 = vand.u32 %v137, 4294901760
    %v2738 = vsub.f32 %v137, %v2737
    %2739 = vmatpush.msra.mxu0 %v2738
    %v2740 = vand.u32 %v135, 4294901760
    %v2741 = vsub.f32 %v135, %v2740
    %2742 = vmatpush.msra.mxu0 %v2741
    %v2743 = vand.u32 %v133, 4294901760
    %v2744 = vsub.f32 %v133, %v2743
    %2745 = vmatpush.msra.mxu0 %v2744
    %v2746 = vand.u32 %v131, 4294901760
    %v2747 = vsub.f32 %v131, %v2746
    %2748 = vmatpush.msra.mxu0 %v2747
    %v2749 = vand.u32 %v129, 4294901760
    %v2750 = vsub.f32 %v129, %v2749
    %2751 = vmatpush.msra.mxu0 %v2750
    %v2752 = vand.u32 %v165, 4294901760
    %v2753 = vsub.f32 %v165, %v2752
    %2754 = vmatmul.f32.gmra.mxu0 %v2753
    %v2755 = vpop.f32.mrf.mxu0
    %v2756 = vadd.f32 %v2702, %v2755
    %2757 = vdwg.mxu0
    %v2758 = vand.u32 %v159, 4294901760
    %2759 = vmatpush.msra.mxu0 %v2758
    %v2760 = vand.u32 %v157, 4294901760
    %2761 = vmatpush.msra.mxu0 %v2760
    %v2762 = vand.u32 %v155, 4294901760
    %2763 = vmatpush.msra.mxu0 %v2762
    %v2764 = vand.u32 %v153, 4294901760
    %2765 = vmatpush.msra.mxu0 %v2764
    %v2766 = vand.u32 %v151, 4294901760
    %2767 = vmatpush.msra.mxu0 %v2766
    %v2768 = vand.u32 %v149, 4294901760
    %2769 = vmatpush.msra.mxu0 %v2768
    %v2770 = vand.u32 %v147, 4294901760
    %2771 = vmatpush.msra.mxu0 %v2770
    %v2772 = vand.u32 %v145, 4294901760
    %2773 = vmatpush.msra.mxu0 %v2772
    %v2774 = vand.u32 %v143, 4294901760
    %2775 = vmatpush.msra.mxu0 %v2774
    %v2776 = vand.u32 %v141, 4294901760
    %2777 = vmatpush.msra.mxu0 %v2776
    %v2778 = vand.u32 %v139, 4294901760
    %2779 = vmatpush.msra.mxu0 %v2778
    %v2780 = vand.u32 %v137, 4294901760
    %2781 = vmatpush.msra.mxu0 %v2780
    %v2782 = vand.u32 %v135, 4294901760
    %2783 = vmatpush.msra.mxu0 %v2782
    %v2784 = vand.u32 %v133, 4294901760
    %2785 = vmatpush.msra.mxu0 %v2784
    %v2786 = vand.u32 %v131, 4294901760
    %2787 = vmatpush.msra.mxu0 %v2786
    %v2788 = vand.u32 %v129, 4294901760
    %2789 = vmatpush.msra.mxu0 %v2788
    %v2790 = vand.u32 %v165, 4294901760
    %v2791 = vsub.f32 %v165, %v2790
    %v2792 = vand.u32 %v2791, 4294901760
    %2793 = vmatmul.f32.gmra.mxu0 %v2792
    %v2794 = vpop.f32.mrf.mxu0
    %v2795 = vadd.f32 %v2756, %v2794
    %2796 = vdwg.mxu0
    %v2797 = vand.u32 %v159, 4294901760
    %v2798 = vsub.f32 %v159, %v2797
    %v2799 = vand.u32 %v2798, 4294901760
    %2800 = vmatpush.msra.mxu0 %v2799
    %v2801 = vand.u32 %v157, 4294901760
    %v2802 = vsub.f32 %v157, %v2801
    %v2803 = vand.u32 %v2802, 4294901760
    %2804 = vmatpush.msra.mxu0 %v2803
    %v2805 = vand.u32 %v155, 4294901760
    %v2806 = vsub.f32 %v155, %v2805
    %v2807 = vand.u32 %v2806, 4294901760
    %2808 = vmatpush.msra.mxu0 %v2807
    %v2809 = vand.u32 %v153, 4294901760
    %v2810 = vsub.f32 %v153, %v2809
    %v2811 = vand.u32 %v2810, 4294901760
    %2812 = vmatpush.msra.mxu0 %v2811
    %v2813 = vand.u32 %v151, 4294901760
    %v2814 = vsub.f32 %v151, %v2813
    %v2815 = vand.u32 %v2814, 4294901760
    %2816 = vmatpush.msra.mxu0 %v2815
    %v2817 = vand.u32 %v149, 4294901760
    %v2818 = vsub.f32 %v149, %v2817
    %v2819 = vand.u32 %v2818, 4294901760
    %2820 = vmatpush.msra.mxu0 %v2819
    %v2821 = vand.u32 %v147, 4294901760
    %v2822 = vsub.f32 %v147, %v2821
    %v2823 = vand.u32 %v2822, 4294901760
    %2824 = vmatpush.msra.mxu0 %v2823
    %v2825 = vand.u32 %v145, 4294901760
    %v2826 = vsub.f32 %v145, %v2825
    %v2827 = vand.u32 %v2826, 4294901760
    %2828 = vmatpush.msra.mxu0 %v2827
    %v2829 = vand.u32 %v143, 4294901760
    %v2830 = vsub.f32 %v143, %v2829
    %v2831 = vand.u32 %v2830, 4294901760
    %2832 = vmatpush.msra.mxu0 %v2831
    %v2833 = vand.u32 %v141, 4294901760
    %v2834 = vsub.f32 %v141, %v2833
    %v2835 = vand.u32 %v2834, 4294901760
    %2836 = vmatpush.msra.mxu0 %v2835
    %v2837 = vand.u32 %v139, 4294901760
    %v2838 = vsub.f32 %v139, %v2837
    %v2839 = vand.u32 %v2838, 4294901760
    %2840 = vmatpush.msra.mxu0 %v2839
    %v2841 = vand.u32 %v137, 4294901760
    %v2842 = vsub.f32 %v137, %v2841
    %v2843 = vand.u32 %v2842, 4294901760
    %2844 = vmatpush.msra.mxu0 %v2843
    %v2845 = vand.u32 %v135, 4294901760
    %v2846 = vsub.f32 %v135, %v2845
    %v2847 = vand.u32 %v2846, 4294901760
    %2848 = vmatpush.msra.mxu0 %v2847
    %v2849 = vand.u32 %v133, 4294901760
    %v2850 = vsub.f32 %v133, %v2849
    %v2851 = vand.u32 %v2850, 4294901760
    %2852 = vmatpush.msra.mxu0 %v2851
    %v2853 = vand.u32 %v131, 4294901760
    %v2854 = vsub.f32 %v131, %v2853
    %v2855 = vand.u32 %v2854, 4294901760
    %2856 = vmatpush.msra.mxu0 %v2855
    %v2857 = vand.u32 %v129, 4294901760
    %v2858 = vsub.f32 %v129, %v2857
    %v2859 = vand.u32 %v2858, 4294901760
    %2860 = vmatpush.msra.mxu0 %v2859
    %v2861 = vand.u32 %v165, 4294901760
    %2862 = vmatmul.f32.gmra.mxu0 %v2861
    %v2863 = vpop.f32.mrf.mxu0
    %v2864 = vadd.f32 %v2795, %v2863
    %2865 = vdwg.mxu0
    %v2866 = vand.u32 %v159, 4294901760
    %2867 = vmatpush.msra.mxu0 %v2866
    %v2868 = vand.u32 %v157, 4294901760
    %2869 = vmatpush.msra.mxu0 %v2868
    %v2870 = vand.u32 %v155, 4294901760
    %2871 = vmatpush.msra.mxu0 %v2870
    %v2872 = vand.u32 %v153, 4294901760
    %2873 = vmatpush.msra.mxu0 %v2872
    %v2874 = vand.u32 %v151, 4294901760
    %2875 = vmatpush.msra.mxu0 %v2874
    %v2876 = vand.u32 %v149, 4294901760
    %2877 = vmatpush.msra.mxu0 %v2876
    %v2878 = vand.u32 %v147, 4294901760
    %2879 = vmatpush.msra.mxu0 %v2878
    %v2880 = vand.u32 %v145, 4294901760
    %2881 = vmatpush.msra.mxu0 %v2880
    %v2882 = vand.u32 %v143, 4294901760
    %2883 = vmatpush.msra.mxu0 %v2882
    %v2884 = vand.u32 %v141, 4294901760
    %2885 = vmatpush.msra.mxu0 %v2884
    %v2886 = vand.u32 %v139, 4294901760
    %2887 = vmatpush.msra.mxu0 %v2886
    %v2888 = vand.u32 %v137, 4294901760
    %2889 = vmatpush.msra.mxu0 %v2888
    %v2890 = vand.u32 %v135, 4294901760
    %2891 = vmatpush.msra.mxu0 %v2890
    %v2892 = vand.u32 %v133, 4294901760
    %2893 = vmatpush.msra.mxu0 %v2892
    %v2894 = vand.u32 %v131, 4294901760
    %2895 = vmatpush.msra.mxu0 %v2894
    %v2896 = vand.u32 %v129, 4294901760
    %2897 = vmatpush.msra.mxu0 %v2896
    %v2898 = vand.u32 %v165, 4294901760
    %2899 = vmatmul.f32.gmra.mxu0 %v2898
    %v2900 = vpop.f32.mrf.mxu0
    %v2901 = vadd.f32 %v2864, %v2900
    %2902 = vdwg.mxu0
    %v2905 = vrot.slane %v2901, 7
    %vm2906 = vcmask 1040384
    %v2907 = vsel %vm2906, %v1537, %v2905
    %v2909 = vlaneseq
    %vm2910 = vcmp.ge.s32.totalorder %v2909, 0
    %vm2911 = vcmp.lt.s32.totalorder %v2909, 256
    %vm2912 = vmand %vm2910, %vm2911
    %2913 = vst.msk [vmem:[#allocation5] sm:$0x3] %vm2912, %v2907
    // Predicated region
    $region18: #{fwd.1} parent=1 // pred_check
      _
    $region19: #{fwd.1} parent=1 // pred_check_branch
      %2915 = sbr.rel (0) target = $region21
    $region20: #{fwd.1} parent=1 // pred_region
      %2917 = vsyncadd [#allocation4], 0
      %s2919 = sshll.u32 [#allocation5], 4
      %s2920 = int_to_ptr.vmem [resolvable:$true] %s2919
      %s2921 = sshll.u32 %s3, 4
      %s2922 = int_to_ptr.hbm [resolvable:$true] %s2921
      %2924 = dma.vmem_to_hbm [thread:$0]  %s2920, 32, %s2922, [#allocation4]
    $region21: #{fwd.1} parent=1 // pred_fallthru
      _
    // Predicated region
    $region22: #{fwd.1} parent=1 // pred_check
      _
    $region23: #{fwd.1} parent=1 // pred_check_branch
      %2926 = sbr.rel (0) target = $region25
    $region24: #{fwd.1} parent=1 // pred_region
      %2928 = dma.done [#allocation4], 32
    $region25: #{fwd.1} parent=1 // pred_fallthru
      _
    %2929 = vsyncpa [#allocation3], 1
    %2930 = vsyncpa [#allocation4], 1

</llo_original>
